<compile_context>
chip_gen: v5e
topology: v5e:2x2
jax: 0.10.0
libtpu: 0.0.40
codegen_flags: <defaults>
</compile_context>

<pallas_src>
import jax
import jax.numpy as jnp
from jax.experimental import pallas as pl
from jax.experimental.pallas import tpu as pltpu

# ---- model dimensions (small, consistent with the module's forward) ----
B = 2      # batch
L = 8      # max text length (x_len_max)
LA = 4     # max aspect length
E = 32     # embed_dim
H = 32     # hidden_dim
P = 3      # polarities_dim
V = 50     # vocab size (id 0 = pad)
G = 4 * H  # 128 = LSTM gate width = one full vreg lane width

# ---- weight-pack row offsets (every block 128 lanes wide, 8-row aligned) ----
R_WIA = 0            # (128, 4H) rows 0:E = aspect half of W_ih^T (g cols x2)
R_WIW = 128          # (128, 4H) rows 0:E = word   half of W_ih^T (g cols x2)
R_WHH = 256          # (H, 4H)   W_hh^T (g cols x2)
R_B   = 288          # (1, 4H)   b_ih + b_hh (g cols x2)
R_WH  = 296          # (H, 128)  cols 0:H = W_h^T
R_WV  = 328          # (128,128) rows 0:E, cols 0:E = W_v^T
R_WMH = 456          # (1, 128)  cols 0:H = w_m[:H]
R_WMV = 464          # (1, 128)  cols 0:E = w_m[H:]
R_WP  = 472          # (H, 128)  cols 0:H = W_p^T
R_WX  = 504          # (H, 128)  cols 0:H = W_x^T
R_DW  = 536          # (128,128) rows 0:H, cols 0:P = dense W^T
R_DB  = 664          # (1, 128)  cols 0:P = dense bias
W_ROWS = 672         # multiple of 8 sublanes


def atae_kernel(w_ref, emb_ref, text_ref, asp_ref, out_ref):
    f32 = jnp.float32

    # ---------------- static weight views (8-row aligned slices) ----------------
    wia = w_ref[R_WIA:R_WIA + G, :]
    wiw = w_ref[R_WIW:R_WIW + G, :]
    whh = w_ref[R_WHH:R_WHH + H, :]
    b = w_ref[R_B:R_B + 1, :]
    wh = w_ref[R_WH:R_WH + H, :]
    wv = w_ref[R_WV:R_WV + G, :]
    wmh = w_ref[R_WMH:R_WMH + 1, :]
    wmv = w_ref[R_WMV:R_WMV + 1, :]
    wp = w_ref[R_WP:R_WP + H, :]
    wx = w_ref[R_WX:R_WX + H, :]
    dw = w_ref[R_DW:R_DW + G, :]
    db = w_ref[R_DB:R_DB + 1, :]

    # -------- in-kernel embedding gather + aspect pooling (off the chain) -------
    asp_rows = []
    for bb in range(B):
        acc = jnp.zeros((1, G), f32)
        cnt = 0
        for j in range(LA):
            idx = asp_ref[bb, j]
            acc = acc + emb_ref[idx]          # pad id 0 adds emb[0], as in the reference sum
            cnt = cnt + (idx != 0).astype(jnp.int32)
        cnt = jnp.maximum(cnt, 1)             # guard: all-pad aspect would be 0/0 in the reference
        asp_rows.append(acc / cnt.astype(f32))
    aspect_pool = jnp.concatenate(asp_rows, axis=0)        # (B, 128), lanes 0:E live

    xrows = []                                              # time-major word embeddings
    for t in range(L):
        for bb in range(B):
            xrows.append(emb_ref[text_ref[bb, t]])
    x_words = jnp.concatenate(xrows, axis=0)                # (L*B, 128), lanes 0:E live

    # per-step (B, H) validity masks from SMEM scalar splats, built ahead of the
    # recurrence (trailing padding -> (id != 0) == (t < x_len)).
    masks = []
    for t in range(L):
        rows = []
        for bb in range(B):
            valid = (text_ref[bb, t] != 0).astype(f32)
            rows.append(jnp.full((1, H), valid, dtype=f32))
        masks.append(jnp.concatenate(rows, axis=0))         # (B, H)

    # -------- LSTM: everything except h @ W_hh hoisted off the serial chain -----
    # aspect contribution is constant over the sequence -> folded into the base.
    base = jnp.dot(aspect_pool, wia, preferred_element_type=f32) + b   # (B, 4H)
    xw = jnp.dot(x_words, wiw, preferred_element_type=f32)             # (L*B, 4H)

    h = jnp.zeros((B, H), f32)
    c = jnp.zeros((B, H), f32)
    h_outs = []
    scores = []
    for t in range(L):
        gates = base + xw[t * B:(t + 1) * B, :] + jnp.dot(
            h, whh, preferred_element_type=f32)                        # (B, 4H)
        sig = jax.nn.sigmoid(gates)        # single EUP push for all four gates
        i_g = sig[:, 0:H]
        f_g = sig[:, H:2 * H]
        o_g = sig[:, 3 * H:4 * H]
        g_g = 2.0 * sig[:, 2 * H:3 * H] - 1.0   # tanh via pre-scaled g columns
        c_cand = f_g * c + i_g * g_g
        h_cand = o_g * jnp.tanh(c_cand)
        m = masks[t]
        h = h + m * (h_cand - h)           # freeze state past each sequence length
        c = c + m * (c_cand - c)
        h_out = m * h_cand                 # pad_packed semantics: zeros past length
        h_outs.append(h_out)
        # per-step attention score; independent of the h/c carry, overlaps with
        # the next step's h @ W_hh.
        hx = jnp.tanh(jnp.dot(h_out, wh, preferred_element_type=f32))  # (B, 128)
        scores.append(jnp.sum(hx * wmh, axis=-1, keepdims=True))       # (B, 1)
    # h now holds the true final hidden state h_N (frozen at each length).

    # ---------------- SoftAttention ----------------
    vx = jnp.tanh(jnp.dot(aspect_pool, wv, preferred_element_type=f32))  # (B, 128)
    score_v = jnp.sum(vx * wmv, axis=-1, keepdims=True)                  # (B, 1)
    s = jnp.concatenate(scores, axis=1) + score_v                        # (B, L)
    # softmax over the sequence axis (unmasked, as in the reference module)
    s = s - jnp.max(s, axis=1, keepdims=True)
    e = jnp.exp(s)
    alpha = e * pl.reciprocal(jnp.sum(e, axis=1, keepdims=True), approx=False)

    r = jnp.zeros((B, H), f32)
    for t in range(L):
        r = r + alpha[:, t:t + 1] * h_outs[t]                            # (B, H)

    hs = jnp.tanh(jnp.dot(r, wp, preferred_element_type=f32)
                  + jnp.dot(h, wx, preferred_element_type=f32))          # (B, 128)

    # ---------------- dense head (lane-dense (B,128) output) ----------------
    out_ref[...] = jnp.dot(hs, dw, preferred_element_type=f32) + db


def init_params(key):
    ks = jax.random.split(key, 12)
    s = 0.1
    emb = jax.random.normal(ks[0], (V, E), jnp.float32) * s
    emb = emb.at[0].set(0.0)   # pad row
    return {
        "embedding": emb,
        # LSTM (PyTorch layout: (4H, in)); gate order i, f, g, o
        "w_ih": jax.random.normal(ks[1], (4 * H, 2 * E), jnp.float32) * s,
        "w_hh": jax.random.normal(ks[2], (4 * H, H), jnp.float32) * s,
        "b_ih": jax.random.normal(ks[3], (4 * H,), jnp.float32) * s,
        "b_hh": jax.random.normal(ks[4], (4 * H,), jnp.float32) * s,
        # SoftAttention
        "w_h": jax.random.normal(ks[5], (H, H), jnp.float32) * s,
        "w_v": jax.random.normal(ks[6], (E, E), jnp.float32) * s,
        "weight_m": jax.random.normal(ks[7], (H + E, 1), jnp.float32) * s,
        "w_p": jax.random.normal(ks[8], (H, H), jnp.float32) * s,
        "w_x": jax.random.normal(ks[9], (H, H), jnp.float32) * s,
        # dense
        "dense_w": jax.random.normal(ks[10], (P, H), jnp.float32) * s,
        "dense_b": jax.random.normal(ks[11], (P,), jnp.float32) * s,
    }


def pack_model(params):
    """One-time packing of all weights + embedding table (NOT in the call path).

    g-gate columns (2H:3H) of W_ih/W_hh/bias are pre-scaled by 2 so the kernel
    recovers tanh(z) = 2*sigmoid(2z) - 1 from a single sigmoid push.
    """
    gate_scale = jnp.ones((G,), jnp.float32).at[2 * H:3 * H].set(2.0)
    wih_t = params["w_ih"].T * gate_scale[None, :]     # (2E, 4H)
    whh_t = params["w_hh"].T * gate_scale[None, :]     # (H, 4H)
    bias = (params["b_ih"] + params["b_hh"]) * gate_scale

    wpack = jnp.zeros((W_ROWS, G), jnp.float32)
    wpack = wpack.at[R_WIA:R_WIA + E, :].set(wih_t[0:E, :])       # aspect half
    wpack = wpack.at[R_WIW:R_WIW + E, :].set(wih_t[E:2 * E, :])   # word half
    wpack = wpack.at[R_WHH:R_WHH + H, :].set(whh_t)
    wpack = wpack.at[R_B, :].set(bias)
    wpack = wpack.at[R_WH:R_WH + H, 0:H].set(params["w_h"].T)
    wpack = wpack.at[R_WV:R_WV + E, 0:E].set(params["w_v"].T)
    wpack = wpack.at[R_WMH, 0:H].set(params["weight_m"][0:H, 0])
    wpack = wpack.at[R_WMV, 0:E].set(params["weight_m"][H:H + E, 0])
    wpack = wpack.at[R_WP:R_WP + H, 0:H].set(params["w_p"].T)
    wpack = wpack.at[R_WX:R_WX + H, 0:H].set(params["w_x"].T)
    wpack = wpack.at[R_DW:R_DW + H, 0:P].set(params["dense_w"].T)
    wpack = wpack.at[R_DB, 0:P].set(params["dense_b"])

    # embedding table, lane-padded to 128 so in-kernel gathers are full rows
    # indexed on the (untiled) leading axis.
    emb_pack = jnp.zeros((V, 1, G), jnp.float32)
    emb_pack = emb_pack.at[:, 0, 0:E].set(params["embedding"])
    return wpack, emb_pack


@jax.jit
def atae_lstm_forward(text, aspect_text, wpack, emb_pack):
    # Gridless, fully VMEM-resident kernel (<1 MiB working set).  For
    # production batch sizes, add a grid over batch with
    # dimension_semantics=("parallel",) to shard across the 2 TCs on v7x.
    vmem = pl.BlockSpec(memory_space=pltpu.MemorySpace.VMEM)
    smem = pl.BlockSpec(memory_space=pltpu.MemorySpace.SMEM)
    out_full = pl.pallas_call(
        atae_kernel,
        out_shape=jax.ShapeDtypeStruct((B, G), jnp.float32),  # lane-dense output
        in_specs=[vmem, vmem, smem, smem],
        out_specs=vmem,
    )(wpack, emb_pack, text, aspect_text)
    return out_full[:, :P]


if __name__ == "__main__":
    key = jax.random.PRNGKey(0)
    k_par, k_txt, k_asp = jax.random.split(key, 3)

    params = init_params(k_par)
    # one-time packing, outside the per-call path
    wpack, emb_pack = pack_model(params)
    wpack = jax.block_until_ready(wpack)
    emb_pack = jax.block_until_ready(emb_pack)

    # text ids: batch of 2; sequence 0 is full length (so x_len_max == L),
    # sequence 1 is padded (length 6).
    text = jax.random.randint(k_txt, (B, L), 1, V, dtype=jnp.int32)
    text = text.at[1, 6:].set(0)

    # aspect ids: sequence 1 padded (length 3).
    aspect_text = jax.random.randint(k_asp, (B, LA), 1, V, dtype=jnp.int32)
    aspect_text = aspect_text.at[1, 3:].set(0)

    out = atae_lstm_forward(text, aspect_text, wpack, emb_pack)
    out = jax.block_until_ready(out)

    assert out.shape == (B, P) and out.dtype == jnp.float32
    assert bool(jnp.all(jnp.isfinite(out)))
    print("KERNEL_OK")
</pallas_src>

<mosaic_0001>
module attributes {stable_mosaic.version = 11 : i64} {
  func.func @atae_kernel(%arg0: memref<672x128xf32, #tpu.memory_space<vmem>>, %arg1: memref<50x1x128xf32, #tpu.memory_space<vmem>>, %arg2: memref<2x8xi32, #tpu.memory_space<smem>>, %arg3: memref<2x4xi32, #tpu.memory_space<smem>>, %arg4: memref<2x128xf32, #tpu.memory_space<vmem>>) attributes {dimension_semantics = [], scalar_prefetch = 0 : i64, scratch_operands = 0 : i64, tpu.core_type = #tpu.core_type<tc>} {
    %c0 = arith.constant 0 : index
    %c0_0 = arith.constant 0 : index
    %0 = vector.load %arg0[%c0, %c0_0] : memref<672x128xf32, #tpu.memory_space<vmem>>, vector<128x128xf32>
    %c128 = arith.constant 128 : index
    %c0_1 = arith.constant 0 : index
    %1 = vector.load %arg0[%c128, %c0_1] : memref<672x128xf32, #tpu.memory_space<vmem>>, vector<128x128xf32>
    %c256 = arith.constant 256 : index
    %c0_2 = arith.constant 0 : index
    %2 = vector.load %arg0[%c256, %c0_2] : memref<672x128xf32, #tpu.memory_space<vmem>>, vector<32x128xf32>
    %c288 = arith.constant 288 : index
    %c0_3 = arith.constant 0 : index
    %3 = vector.load %arg0[%c288, %c0_3] : memref<672x128xf32, #tpu.memory_space<vmem>>, vector<1x128xf32>
    %c296 = arith.constant 296 : index
    %c0_4 = arith.constant 0 : index
    %4 = vector.load %arg0[%c296, %c0_4] : memref<672x128xf32, #tpu.memory_space<vmem>>, vector<32x128xf32>
    %c328 = arith.constant 328 : index
    %c0_5 = arith.constant 0 : index
    %5 = vector.load %arg0[%c328, %c0_5] : memref<672x128xf32, #tpu.memory_space<vmem>>, vector<128x128xf32>
    %c456 = arith.constant 456 : index
    %c0_6 = arith.constant 0 : index
    %6 = vector.load %arg0[%c456, %c0_6] : memref<672x128xf32, #tpu.memory_space<vmem>>, vector<1x128xf32>
    %c464 = arith.constant 464 : index
    %c0_7 = arith.constant 0 : index
    %7 = vector.load %arg0[%c464, %c0_7] : memref<672x128xf32, #tpu.memory_space<vmem>>, vector<1x128xf32>
    %c472 = arith.constant 472 : index
    %c0_8 = arith.constant 0 : index
    %8 = vector.load %arg0[%c472, %c0_8] : memref<672x128xf32, #tpu.memory_space<vmem>>, vector<32x128xf32>
    %c504 = arith.constant 504 : index
    %c0_9 = arith.constant 0 : index
    %9 = vector.load %arg0[%c504, %c0_9] : memref<672x128xf32, #tpu.memory_space<vmem>>, vector<32x128xf32>
    %c536 = arith.constant 536 : index
    %c0_10 = arith.constant 0 : index
    %10 = vector.load %arg0[%c536, %c0_10] : memref<672x128xf32, #tpu.memory_space<vmem>>, vector<128x128xf32>
    %c664 = arith.constant 664 : index
    %c0_11 = arith.constant 0 : index
    %11 = vector.load %arg0[%c664, %c0_11] : memref<672x128xf32, #tpu.memory_space<vmem>>, vector<1x128xf32>
    %cst = arith.constant 0.000000e+00 : f32
    %12 = vector.broadcast %cst : f32 to vector<1x128xf32>
    %c0_12 = arith.constant 0 : index
    %c0_13 = arith.constant 0 : index
    %13 = memref.load %arg3[%c0_12, %c0_13] : memref<2x4xi32, #tpu.memory_space<smem>>
    %14 = arith.index_cast %13 : i32 to index
    %c0_14 = arith.constant 0 : index
    %c0_15 = arith.constant 0 : index
    %15 = vector.load %arg1[%14, %c0_14, %c0_15] : memref<50x1x128xf32, #tpu.memory_space<vmem>>, vector<1x1x128xf32>
    %16 = vector.shape_cast %15 : vector<1x1x128xf32> to vector<1x128xf32>
    %17 = arith.addf %12, %16 : vector<1x128xf32>
    %c0_i32 = arith.constant 0 : i32
    %18 = arith.cmpi ne, %13, %c0_i32 : i32
    %19 = arith.extui %18 : i1 to i32
    %c0_i32_16 = arith.constant 0 : i32
    %20 = arith.addi %c0_i32_16, %19 : i32
    %c0_17 = arith.constant 0 : index
    %c1 = arith.constant 1 : index
    %21 = memref.load %arg3[%c0_17, %c1] : memref<2x4xi32, #tpu.memory_space<smem>>
    %22 = arith.index_cast %21 : i32 to index
    %c0_18 = arith.constant 0 : index
    %c0_19 = arith.constant 0 : index
    %23 = vector.load %arg1[%22, %c0_18, %c0_19] : memref<50x1x128xf32, #tpu.memory_space<vmem>>, vector<1x1x128xf32>
    %24 = vector.shape_cast %23 : vector<1x1x128xf32> to vector<1x128xf32>
    %25 = arith.addf %17, %24 : vector<1x128xf32>
    %c0_i32_20 = arith.constant 0 : i32
    %26 = arith.cmpi ne, %21, %c0_i32_20 : i32
    %27 = arith.extui %26 : i1 to i32
    %28 = arith.addi %20, %27 : i32
    %c0_21 = arith.constant 0 : index
    %c2 = arith.constant 2 : index
    %29 = memref.load %arg3[%c0_21, %c2] : memref<2x4xi32, #tpu.memory_space<smem>>
    %30 = arith.index_cast %29 : i32 to index
    %c0_22 = arith.constant 0 : index
    %c0_23 = arith.constant 0 : index
    %31 = vector.load %arg1[%30, %c0_22, %c0_23] : memref<50x1x128xf32, #tpu.memory_space<vmem>>, vector<1x1x128xf32>
    %32 = vector.shape_cast %31 : vector<1x1x128xf32> to vector<1x128xf32>
    %33 = arith.addf %25, %32 : vector<1x128xf32>
    %c0_i32_24 = arith.constant 0 : i32
    %34 = arith.cmpi ne, %29, %c0_i32_24 : i32
    %35 = arith.extui %34 : i1 to i32
    %36 = arith.addi %28, %35 : i32
    %c0_25 = arith.constant 0 : index
    %c3 = arith.constant 3 : index
    %37 = memref.load %arg3[%c0_25, %c3] : memref<2x4xi32, #tpu.memory_space<smem>>
    %38 = arith.index_cast %37 : i32 to index
    %c0_26 = arith.constant 0 : index
    %c0_27 = arith.constant 0 : index
    %39 = vector.load %arg1[%38, %c0_26, %c0_27] : memref<50x1x128xf32, #tpu.memory_space<vmem>>, vector<1x1x128xf32>
    %40 = vector.shape_cast %39 : vector<1x1x128xf32> to vector<1x128xf32>
    %41 = arith.addf %33, %40 : vector<1x128xf32>
    %c0_i32_28 = arith.constant 0 : i32
    %42 = arith.cmpi ne, %37, %c0_i32_28 : i32
    %43 = arith.extui %42 : i1 to i32
    %44 = arith.addi %36, %43 : i32
    %c1_i32 = arith.constant 1 : i32
    %45 = arith.maxsi %44, %c1_i32 : i32
    %46 = arith.sitofp %45 : i32 to f32
    %47 = vector.broadcast %46 : f32 to vector<1x128xf32>
    %48 = arith.divf %41, %47 : vector<1x128xf32>
    %cst_29 = arith.constant 0.000000e+00 : f32
    %49 = vector.broadcast %cst_29 : f32 to vector<1x128xf32>
    %c1_30 = arith.constant 1 : index
    %c0_31 = arith.constant 0 : index
    %50 = memref.load %arg3[%c1_30, %c0_31] : memref<2x4xi32, #tpu.memory_space<smem>>
    %51 = arith.index_cast %50 : i32 to index
    %c0_32 = arith.constant 0 : index
    %c0_33 = arith.constant 0 : index
    %52 = vector.load %arg1[%51, %c0_32, %c0_33] : memref<50x1x128xf32, #tpu.memory_space<vmem>>, vector<1x1x128xf32>
    %53 = vector.shape_cast %52 : vector<1x1x128xf32> to vector<1x128xf32>
    %54 = arith.addf %49, %53 : vector<1x128xf32>
    %c0_i32_34 = arith.constant 0 : i32
    %55 = arith.cmpi ne, %50, %c0_i32_34 : i32
    %56 = arith.extui %55 : i1 to i32
    %c0_i32_35 = arith.constant 0 : i32
    %57 = arith.addi %c0_i32_35, %56 : i32
    %c1_36 = arith.constant 1 : index
    %c1_37 = arith.constant 1 : index
    %58 = memref.load %arg3[%c1_36, %c1_37] : memref<2x4xi32, #tpu.memory_space<smem>>
    %59 = arith.index_cast %58 : i32 to index
    %c0_38 = arith.constant 0 : index
    %c0_39 = arith.constant 0 : index
    %60 = vector.load %arg1[%59, %c0_38, %c0_39] : memref<50x1x128xf32, #tpu.memory_space<vmem>>, vector<1x1x128xf32>
    %61 = vector.shape_cast %60 : vector<1x1x128xf32> to vector<1x128xf32>
    %62 = arith.addf %54, %61 : vector<1x128xf32>
    %c0_i32_40 = arith.constant 0 : i32
    %63 = arith.cmpi ne, %58, %c0_i32_40 : i32
    %64 = arith.extui %63 : i1 to i32
    %65 = arith.addi %57, %64 : i32
    %c1_41 = arith.constant 1 : index
    %c2_42 = arith.constant 2 : index
    %66 = memref.load %arg3[%c1_41, %c2_42] : memref<2x4xi32, #tpu.memory_space<smem>>
    %67 = arith.index_cast %66 : i32 to index
    %c0_43 = arith.constant 0 : index
    %c0_44 = arith.constant 0 : index
    %68 = vector.load %arg1[%67, %c0_43, %c0_44] : memref<50x1x128xf32, #tpu.memory_space<vmem>>, vector<1x1x128xf32>
    %69 = vector.shape_cast %68 : vector<1x1x128xf32> to vector<1x128xf32>
    %70 = arith.addf %62, %69 : vector<1x128xf32>
    %c0_i32_45 = arith.constant 0 : i32
    %71 = arith.cmpi ne, %66, %c0_i32_45 : i32
    %72 = arith.extui %71 : i1 to i32
    %73 = arith.addi %65, %72 : i32
    %c1_46 = arith.constant 1 : index
    %c3_47 = arith.constant 3 : index
    %74 = memref.load %arg3[%c1_46, %c3_47] : memref<2x4xi32, #tpu.memory_space<smem>>
    %75 = arith.index_cast %74 : i32 to index
    %c0_48 = arith.constant 0 : index
    %c0_49 = arith.constant 0 : index
    %76 = vector.load %arg1[%75, %c0_48, %c0_49] : memref<50x1x128xf32, #tpu.memory_space<vmem>>, vector<1x1x128xf32>
    %77 = vector.shape_cast %76 : vector<1x1x128xf32> to vector<1x128xf32>
    %78 = arith.addf %70, %77 : vector<1x128xf32>
    %c0_i32_50 = arith.constant 0 : i32
    %79 = arith.cmpi ne, %74, %c0_i32_50 : i32
    %80 = arith.extui %79 : i1 to i32
    %81 = arith.addi %73, %80 : i32
    %c1_i32_51 = arith.constant 1 : i32
    %82 = arith.maxsi %81, %c1_i32_51 : i32
    %83 = arith.sitofp %82 : i32 to f32
    %84 = vector.broadcast %83 : f32 to vector<1x128xf32>
    %85 = arith.divf %78, %84 : vector<1x128xf32>
    %86 = tpu.concatenate %48, %85 in 0 : vector<1x128xf32>, vector<1x128xf32> -> vector<2x128xf32>
    %c0_52 = arith.constant 0 : index
    %c0_53 = arith.constant 0 : index
    %87 = memref.load %arg2[%c0_52, %c0_53] : memref<2x8xi32, #tpu.memory_space<smem>>
    %88 = arith.index_cast %87 : i32 to index
    %c0_54 = arith.constant 0 : index
    %c0_55 = arith.constant 0 : index
    %89 = vector.load %arg1[%88, %c0_54, %c0_55] : memref<50x1x128xf32, #tpu.memory_space<vmem>>, vector<1x1x128xf32>
    %90 = vector.shape_cast %89 : vector<1x1x128xf32> to vector<1x128xf32>
    %c1_56 = arith.constant 1 : index
    %c0_57 = arith.constant 0 : index
    %91 = memref.load %arg2[%c1_56, %c0_57] : memref<2x8xi32, #tpu.memory_space<smem>>
    %92 = arith.index_cast %91 : i32 to index
    %c0_58 = arith.constant 0 : index
    %c0_59 = arith.constant 0 : index
    %93 = vector.load %arg1[%92, %c0_58, %c0_59] : memref<50x1x128xf32, #tpu.memory_space<vmem>>, vector<1x1x128xf32>
    %94 = vector.shape_cast %93 : vector<1x1x128xf32> to vector<1x128xf32>
    %c0_60 = arith.constant 0 : index
    %c1_61 = arith.constant 1 : index
    %95 = memref.load %arg2[%c0_60, %c1_61] : memref<2x8xi32, #tpu.memory_space<smem>>
    %96 = arith.index_cast %95 : i32 to index
    %c0_62 = arith.constant 0 : index
    %c0_63 = arith.constant 0 : index
    %97 = vector.load %arg1[%96, %c0_62, %c0_63] : memref<50x1x128xf32, #tpu.memory_space<vmem>>, vector<1x1x128xf32>
    %98 = vector.shape_cast %97 : vector<1x1x128xf32> to vector<1x128xf32>
    %c1_64 = arith.constant 1 : index
    %c1_65 = arith.constant 1 : index
    %99 = memref.load %arg2[%c1_64, %c1_65] : memref<2x8xi32, #tpu.memory_space<smem>>
    %100 = arith.index_cast %99 : i32 to index
    %c0_66 = arith.constant 0 : index
    %c0_67 = arith.constant 0 : index
    %101 = vector.load %arg1[%100, %c0_66, %c0_67] : memref<50x1x128xf32, #tpu.memory_space<vmem>>, vector<1x1x128xf32>
    %102 = vector.shape_cast %101 : vector<1x1x128xf32> to vector<1x128xf32>
    %c0_68 = arith.constant 0 : index
    %c2_69 = arith.constant 2 : index
    %103 = memref.load %arg2[%c0_68, %c2_69] : memref<2x8xi32, #tpu.memory_space<smem>>
    %104 = arith.index_cast %103 : i32 to index
    %c0_70 = arith.constant 0 : index
    %c0_71 = arith.constant 0 : index
    %105 = vector.load %arg1[%104, %c0_70, %c0_71] : memref<50x1x128xf32, #tpu.memory_space<vmem>>, vector<1x1x128xf32>
    %106 = vector.shape_cast %105 : vector<1x1x128xf32> to vector<1x128xf32>
    %c1_72 = arith.constant 1 : index
    %c2_73 = arith.constant 2 : index
    %107 = memref.load %arg2[%c1_72, %c2_73] : memref<2x8xi32, #tpu.memory_space<smem>>
    %108 = arith.index_cast %107 : i32 to index
    %c0_74 = arith.constant 0 : index
    %c0_75 = arith.constant 0 : index
    %109 = vector.load %arg1[%108, %c0_74, %c0_75] : memref<50x1x128xf32, #tpu.memory_space<vmem>>, vector<1x1x128xf32>
    %110 = vector.shape_cast %109 : vector<1x1x128xf32> to vector<1x128xf32>
    %c0_76 = arith.constant 0 : index
    %c3_77 = arith.constant 3 : index
    %111 = memref.load %arg2[%c0_76, %c3_77] : memref<2x8xi32, #tpu.memory_space<smem>>
    %112 = arith.index_cast %111 : i32 to index
    %c0_78 = arith.constant 0 : index
    %c0_79 = arith.constant 0 : index
    %113 = vector.load %arg1[%112, %c0_78, %c0_79] : memref<50x1x128xf32, #tpu.memory_space<vmem>>, vector<1x1x128xf32>
    %114 = vector.shape_cast %113 : vector<1x1x128xf32> to vector<1x128xf32>
    %c1_80 = arith.constant 1 : index
    %c3_81 = arith.constant 3 : index
    %115 = memref.load %arg2[%c1_80, %c3_81] : memref<2x8xi32, #tpu.memory_space<smem>>
    %116 = arith.index_cast %115 : i32 to index
    %c0_82 = arith.constant 0 : index
    %c0_83 = arith.constant 0 : index
    %117 = vector.load %arg1[%116, %c0_82, %c0_83] : memref<50x1x128xf32, #tpu.memory_space<vmem>>, vector<1x1x128xf32>
    %118 = vector.shape_cast %117 : vector<1x1x128xf32> to vector<1x128xf32>
    %c0_84 = arith.constant 0 : index
    %c4 = arith.constant 4 : index
    %119 = memref.load %arg2[%c0_84, %c4] : memref<2x8xi32, #tpu.memory_space<smem>>
    %120 = arith.index_cast %119 : i32 to index
    %c0_85 = arith.constant 0 : index
    %c0_86 = arith.constant 0 : index
    %121 = vector.load %arg1[%120, %c0_85, %c0_86] : memref<50x1x128xf32, #tpu.memory_space<vmem>>, vector<1x1x128xf32>
    %122 = vector.shape_cast %121 : vector<1x1x128xf32> to vector<1x128xf32>
    %c1_87 = arith.constant 1 : index
    %c4_88 = arith.constant 4 : index
    %123 = memref.load %arg2[%c1_87, %c4_88] : memref<2x8xi32, #tpu.memory_space<smem>>
    %124 = arith.index_cast %123 : i32 to index
    %c0_89 = arith.constant 0 : index
    %c0_90 = arith.constant 0 : index
    %125 = vector.load %arg1[%124, %c0_89, %c0_90] : memref<50x1x128xf32, #tpu.memory_space<vmem>>, vector<1x1x128xf32>
    %126 = vector.shape_cast %125 : vector<1x1x128xf32> to vector<1x128xf32>
    %c0_91 = arith.constant 0 : index
    %c5 = arith.constant 5 : index
    %127 = memref.load %arg2[%c0_91, %c5] : memref<2x8xi32, #tpu.memory_space<smem>>
    %128 = arith.index_cast %127 : i32 to index
    %c0_92 = arith.constant 0 : index
    %c0_93 = arith.constant 0 : index
    %129 = vector.load %arg1[%128, %c0_92, %c0_93] : memref<50x1x128xf32, #tpu.memory_space<vmem>>, vector<1x1x128xf32>
    %130 = vector.shape_cast %129 : vector<1x1x128xf32> to vector<1x128xf32>
    %c1_94 = arith.constant 1 : index
    %c5_95 = arith.constant 5 : index
    %131 = memref.load %arg2[%c1_94, %c5_95] : memref<2x8xi32, #tpu.memory_space<smem>>
    %132 = arith.index_cast %131 : i32 to index
    %c0_96 = arith.constant 0 : index
    %c0_97 = arith.constant 0 : index
    %133 = vector.load %arg1[%132, %c0_96, %c0_97] : memref<50x1x128xf32, #tpu.memory_space<vmem>>, vector<1x1x128xf32>
    %134 = vector.shape_cast %133 : vector<1x1x128xf32> to vector<1x128xf32>
    %c0_98 = arith.constant 0 : index
    %c6 = arith.constant 6 : index
    %135 = memref.load %arg2[%c0_98, %c6] : memref<2x8xi32, #tpu.memory_space<smem>>
    %136 = arith.index_cast %135 : i32 to index
    %c0_99 = arith.constant 0 : index
    %c0_100 = arith.constant 0 : index
    %137 = vector.load %arg1[%136, %c0_99, %c0_100] : memref<50x1x128xf32, #tpu.memory_space<vmem>>, vector<1x1x128xf32>
    %138 = vector.shape_cast %137 : vector<1x1x128xf32> to vector<1x128xf32>
    %c1_101 = arith.constant 1 : index
    %c6_102 = arith.constant 6 : index
    %139 = memref.load %arg2[%c1_101, %c6_102] : memref<2x8xi32, #tpu.memory_space<smem>>
    %140 = arith.index_cast %139 : i32 to index
    %c0_103 = arith.constant 0 : index
    %c0_104 = arith.constant 0 : index
    %141 = vector.load %arg1[%140, %c0_103, %c0_104] : memref<50x1x128xf32, #tpu.memory_space<vmem>>, vector<1x1x128xf32>
    %142 = vector.shape_cast %141 : vector<1x1x128xf32> to vector<1x128xf32>
    %c0_105 = arith.constant 0 : index
    %c7 = arith.constant 7 : index
    %143 = memref.load %arg2[%c0_105, %c7] : memref<2x8xi32, #tpu.memory_space<smem>>
    %144 = arith.index_cast %143 : i32 to index
    %c0_106 = arith.constant 0 : index
    %c0_107 = arith.constant 0 : index
    %145 = vector.load %arg1[%144, %c0_106, %c0_107] : memref<50x1x128xf32, #tpu.memory_space<vmem>>, vector<1x1x128xf32>
    %146 = vector.shape_cast %145 : vector<1x1x128xf32> to vector<1x128xf32>
    %c1_108 = arith.constant 1 : index
    %c7_109 = arith.constant 7 : index
    %147 = memref.load %arg2[%c1_108, %c7_109] : memref<2x8xi32, #tpu.memory_space<smem>>
    %148 = arith.index_cast %147 : i32 to index
    %c0_110 = arith.constant 0 : index
    %c0_111 = arith.constant 0 : index
    %149 = vector.load %arg1[%148, %c0_110, %c0_111] : memref<50x1x128xf32, #tpu.memory_space<vmem>>, vector<1x1x128xf32>
    %150 = vector.shape_cast %149 : vector<1x1x128xf32> to vector<1x128xf32>
    %151 = tpu.concatenate %90, %94, %98, %102, %106, %110, %114, %118, %122, %126, %130, %134, %138, %142, %146, %150 in 0 : vector<1x128xf32>, vector<1x128xf32>, vector<1x128xf32>, vector<1x128xf32>, vector<1x128xf32>, vector<1x128xf32>, vector<1x128xf32>, vector<1x128xf32>, vector<1x128xf32>, vector<1x128xf32>, vector<1x128xf32>, vector<1x128xf32>, vector<1x128xf32>, vector<1x128xf32>, vector<1x128xf32>, vector<1x128xf32> -> vector<16x128xf32>
    %c0_112 = arith.constant 0 : index
    %c0_113 = arith.constant 0 : index
    %152 = memref.load %arg2[%c0_112, %c0_113] : memref<2x8xi32, #tpu.memory_space<smem>>
    %c0_i32_114 = arith.constant 0 : i32
    %153 = arith.cmpi ne, %152, %c0_i32_114 : i32
    %154 = arith.extui %153 : i1 to i32
    %155 = arith.sitofp %154 : i32 to f32
    %156 = vector.broadcast %155 : f32 to vector<1x32xf32>
    %c1_115 = arith.constant 1 : index
    %c0_116 = arith.constant 0 : index
    %157 = memref.load %arg2[%c1_115, %c0_116] : memref<2x8xi32, #tpu.memory_space<smem>>
    %c0_i32_117 = arith.constant 0 : i32
    %158 = arith.cmpi ne, %157, %c0_i32_117 : i32
    %159 = arith.extui %158 : i1 to i32
    %160 = arith.sitofp %159 : i32 to f32
    %161 = vector.broadcast %160 : f32 to vector<1x32xf32>
    %162 = tpu.concatenate %156, %161 in 0 : vector<1x32xf32>, vector<1x32xf32> -> vector<2x32xf32>
    %c0_118 = arith.constant 0 : index
    %c1_119 = arith.constant 1 : index
    %163 = memref.load %arg2[%c0_118, %c1_119] : memref<2x8xi32, #tpu.memory_space<smem>>
    %c0_i32_120 = arith.constant 0 : i32
    %164 = arith.cmpi ne, %163, %c0_i32_120 : i32
    %165 = arith.extui %164 : i1 to i32
    %166 = arith.sitofp %165 : i32 to f32
    %167 = vector.broadcast %166 : f32 to vector<1x32xf32>
    %c1_121 = arith.constant 1 : index
    %c1_122 = arith.constant 1 : index
    %168 = memref.load %arg2[%c1_121, %c1_122] : memref<2x8xi32, #tpu.memory_space<smem>>
    %c0_i32_123 = arith.constant 0 : i32
    %169 = arith.cmpi ne, %168, %c0_i32_123 : i32
    %170 = arith.extui %169 : i1 to i32
    %171 = arith.sitofp %170 : i32 to f32
    %172 = vector.broadcast %171 : f32 to vector<1x32xf32>
    %173 = tpu.concatenate %167, %172 in 0 : vector<1x32xf32>, vector<1x32xf32> -> vector<2x32xf32>
    %c0_124 = arith.constant 0 : index
    %c2_125 = arith.constant 2 : index
    %174 = memref.load %arg2[%c0_124, %c2_125] : memref<2x8xi32, #tpu.memory_space<smem>>
    %c0_i32_126 = arith.constant 0 : i32
    %175 = arith.cmpi ne, %174, %c0_i32_126 : i32
    %176 = arith.extui %175 : i1 to i32
    %177 = arith.sitofp %176 : i32 to f32
    %178 = vector.broadcast %177 : f32 to vector<1x32xf32>
    %c1_127 = arith.constant 1 : index
    %c2_128 = arith.constant 2 : index
    %179 = memref.load %arg2[%c1_127, %c2_128] : memref<2x8xi32, #tpu.memory_space<smem>>
    %c0_i32_129 = arith.constant 0 : i32
    %180 = arith.cmpi ne, %179, %c0_i32_129 : i32
    %181 = arith.extui %180 : i1 to i32
    %182 = arith.sitofp %181 : i32 to f32
    %183 = vector.broadcast %182 : f32 to vector<1x32xf32>
    %184 = tpu.concatenate %178, %183 in 0 : vector<1x32xf32>, vector<1x32xf32> -> vector<2x32xf32>
    %c0_130 = arith.constant 0 : index
    %c3_131 = arith.constant 3 : index
    %185 = memref.load %arg2[%c0_130, %c3_131] : memref<2x8xi32, #tpu.memory_space<smem>>
    %c0_i32_132 = arith.constant 0 : i32
    %186 = arith.cmpi ne, %185, %c0_i32_132 : i32
    %187 = arith.extui %186 : i1 to i32
    %188 = arith.sitofp %187 : i32 to f32
    %189 = vector.broadcast %188 : f32 to vector<1x32xf32>
    %c1_133 = arith.constant 1 : index
    %c3_134 = arith.constant 3 : index
    %190 = memref.load %arg2[%c1_133, %c3_134] : memref<2x8xi32, #tpu.memory_space<smem>>
    %c0_i32_135 = arith.constant 0 : i32
    %191 = arith.cmpi ne, %190, %c0_i32_135 : i32
    %192 = arith.extui %191 : i1 to i32
    %193 = arith.sitofp %192 : i32 to f32
    %194 = vector.broadcast %193 : f32 to vector<1x32xf32>
    %195 = tpu.concatenate %189, %194 in 0 : vector<1x32xf32>, vector<1x32xf32> -> vector<2x32xf32>
    %c0_136 = arith.constant 0 : index
    %c4_137 = arith.constant 4 : index
    %196 = memref.load %arg2[%c0_136, %c4_137] : memref<2x8xi32, #tpu.memory_space<smem>>
    %c0_i32_138 = arith.constant 0 : i32
    %197 = arith.cmpi ne, %196, %c0_i32_138 : i32
    %198 = arith.extui %197 : i1 to i32
    %199 = arith.sitofp %198 : i32 to f32
    %200 = vector.broadcast %199 : f32 to vector<1x32xf32>
    %c1_139 = arith.constant 1 : index
    %c4_140 = arith.constant 4 : index
    %201 = memref.load %arg2[%c1_139, %c4_140] : memref<2x8xi32, #tpu.memory_space<smem>>
    %c0_i32_141 = arith.constant 0 : i32
    %202 = arith.cmpi ne, %201, %c0_i32_141 : i32
    %203 = arith.extui %202 : i1 to i32
    %204 = arith.sitofp %203 : i32 to f32
    %205 = vector.broadcast %204 : f32 to vector<1x32xf32>
    %206 = tpu.concatenate %200, %205 in 0 : vector<1x32xf32>, vector<1x32xf32> -> vector<2x32xf32>
    %c0_142 = arith.constant 0 : index
    %c5_143 = arith.constant 5 : index
    %207 = memref.load %arg2[%c0_142, %c5_143] : memref<2x8xi32, #tpu.memory_space<smem>>
    %c0_i32_144 = arith.constant 0 : i32
    %208 = arith.cmpi ne, %207, %c0_i32_144 : i32
    %209 = arith.extui %208 : i1 to i32
    %210 = arith.sitofp %209 : i32 to f32
    %211 = vector.broadcast %210 : f32 to vector<1x32xf32>
    %c1_145 = arith.constant 1 : index
    %c5_146 = arith.constant 5 : index
    %212 = memref.load %arg2[%c1_145, %c5_146] : memref<2x8xi32, #tpu.memory_space<smem>>
    %c0_i32_147 = arith.constant 0 : i32
    %213 = arith.cmpi ne, %212, %c0_i32_147 : i32
    %214 = arith.extui %213 : i1 to i32
    %215 = arith.sitofp %214 : i32 to f32
    %216 = vector.broadcast %215 : f32 to vector<1x32xf32>
    %217 = tpu.concatenate %211, %216 in 0 : vector<1x32xf32>, vector<1x32xf32> -> vector<2x32xf32>
    %c0_148 = arith.constant 0 : index
    %c6_149 = arith.constant 6 : index
    %218 = memref.load %arg2[%c0_148, %c6_149] : memref<2x8xi32, #tpu.memory_space<smem>>
    %c0_i32_150 = arith.constant 0 : i32
    %219 = arith.cmpi ne, %218, %c0_i32_150 : i32
    %220 = arith.extui %219 : i1 to i32
    %221 = arith.sitofp %220 : i32 to f32
    %222 = vector.broadcast %221 : f32 to vector<1x32xf32>
    %c1_151 = arith.constant 1 : index
    %c6_152 = arith.constant 6 : index
    %223 = memref.load %arg2[%c1_151, %c6_152] : memref<2x8xi32, #tpu.memory_space<smem>>
    %c0_i32_153 = arith.constant 0 : i32
    %224 = arith.cmpi ne, %223, %c0_i32_153 : i32
    %225 = arith.extui %224 : i1 to i32
    %226 = arith.sitofp %225 : i32 to f32
    %227 = vector.broadcast %226 : f32 to vector<1x32xf32>
    %228 = tpu.concatenate %222, %227 in 0 : vector<1x32xf32>, vector<1x32xf32> -> vector<2x32xf32>
    %c0_154 = arith.constant 0 : index
    %c7_155 = arith.constant 7 : index
    %229 = memref.load %arg2[%c0_154, %c7_155] : memref<2x8xi32, #tpu.memory_space<smem>>
    %c0_i32_156 = arith.constant 0 : i32
    %230 = arith.cmpi ne, %229, %c0_i32_156 : i32
    %231 = arith.extui %230 : i1 to i32
    %232 = arith.sitofp %231 : i32 to f32
    %233 = vector.broadcast %232 : f32 to vector<1x32xf32>
    %c1_157 = arith.constant 1 : index
    %c7_158 = arith.constant 7 : index
    %234 = memref.load %arg2[%c1_157, %c7_158] : memref<2x8xi32, #tpu.memory_space<smem>>
    %c0_i32_159 = arith.constant 0 : i32
    %235 = arith.cmpi ne, %234, %c0_i32_159 : i32
    %236 = arith.extui %235 : i1 to i32
    %237 = arith.sitofp %236 : i32 to f32
    %238 = vector.broadcast %237 : f32 to vector<1x32xf32>
    %239 = tpu.concatenate %233, %238 in 0 : vector<1x32xf32>, vector<1x32xf32> -> vector<2x32xf32>
    %cst_160 = arith.constant dense<0.000000e+00> : vector<2x128xf32>
    %240 = tpu.matmul %86, %0, %cst_160 {dimension_numbers = #tpu.dot_dimension_numbers<[1], [0], [0], [1], [0, 0, 1, 1], [], []>} : vector<2x128xf32>, vector<128x128xf32>, vector<2x128xf32> -> vector<2x128xf32>
    %241 = vector.broadcast %3 : vector<1x128xf32> to vector<2x128xf32>
    %242 = arith.addf %240, %241 : vector<2x128xf32>
    %cst_161 = arith.constant dense<0.000000e+00> : vector<16x128xf32>
    %243 = tpu.matmul %151, %1, %cst_161 {dimension_numbers = #tpu.dot_dimension_numbers<[1], [0], [0], [1], [0, 0, 1, 1], [], []>} : vector<16x128xf32>, vector<128x128xf32>, vector<16x128xf32> -> vector<16x128xf32>
    %cst_162 = arith.constant 0.000000e+00 : f32
    %244 = vector.broadcast %cst_162 : f32 to vector<2x32xf32>
    %cst_163 = arith.constant 0.000000e+00 : f32
    %245 = vector.broadcast %cst_163 : f32 to vector<2x32xf32>
    %246 = vector.extract_strided_slice %243 {offsets = [0, 0], sizes = [2, 128], strides = [1, 1]} : vector<16x128xf32> to vector<2x128xf32>
    %247 = arith.addf %242, %246 : vector<2x128xf32>
    %cst_164 = arith.constant dense<0.000000e+00> : vector<2x128xf32>
    %248 = tpu.matmul %244, %2, %cst_164 {dimension_numbers = #tpu.dot_dimension_numbers<[1], [0], [0], [1], [0, 0, 1, 1], [], []>} : vector<2x32xf32>, vector<32x128xf32>, vector<2x128xf32> -> vector<2x128xf32>
    %249 = arith.addf %247, %248 : vector<2x128xf32>
    %250 = arith.negf %249 : vector<2x128xf32>
    %251 = math.exp %250 : vector<2x128xf32>
    %cst_165 = arith.constant 1.000000e+00 : f32
    %252 = vector.broadcast %cst_165 : f32 to vector<2x128xf32>
    %253 = arith.addf %252, %251 : vector<2x128xf32>
    %254 = arith.divf %252, %253 : vector<2x128xf32>
    %255 = vector.extract_strided_slice %254 {offsets = [0, 0], sizes = [2, 32], strides = [1, 1]} : vector<2x128xf32> to vector<2x32xf32>
    %256 = vector.extract_strided_slice %254 {offsets = [0, 32], sizes = [2, 32], strides = [1, 1]} : vector<2x128xf32> to vector<2x32xf32>
    %257 = vector.extract_strided_slice %254 {offsets = [0, 96], sizes = [2, 32], strides = [1, 1]} : vector<2x128xf32> to vector<2x32xf32>
    %258 = vector.extract_strided_slice %254 {offsets = [0, 64], sizes = [2, 32], strides = [1, 1]} : vector<2x128xf32> to vector<2x32xf32>
    %cst_166 = arith.constant 2.000000e+00 : f32
    %259 = vector.broadcast %cst_166 : f32 to vector<2x32xf32>
    %260 = arith.mulf %259, %258 : vector<2x32xf32>
    %cst_167 = arith.constant 1.000000e+00 : f32
    %261 = vector.broadcast %cst_167 : f32 to vector<2x32xf32>
    %262 = arith.subf %260, %261 : vector<2x32xf32>
    %263 = arith.mulf %256, %245 : vector<2x32xf32>
    %264 = arith.mulf %255, %262 : vector<2x32xf32>
    %265 = arith.addf %263, %264 : vector<2x32xf32>
    %266 = math.tanh %265 : vector<2x32xf32>
    %267 = arith.mulf %257, %266 : vector<2x32xf32>
    %268 = arith.subf %267, %244 : vector<2x32xf32>
    %269 = arith.mulf %162, %268 : vector<2x32xf32>
    %270 = arith.addf %244, %269 : vector<2x32xf32>
    %271 = arith.subf %265, %245 : vector<2x32xf32>
    %272 = arith.mulf %162, %271 : vector<2x32xf32>
    %273 = arith.addf %245, %272 : vector<2x32xf32>
    %274 = arith.mulf %162, %267 : vector<2x32xf32>
    %cst_168 = arith.constant dense<0.000000e+00> : vector<2x128xf32>
    %275 = tpu.matmul %274, %4, %cst_168 {dimension_numbers = #tpu.dot_dimension_numbers<[1], [0], [0], [1], [0, 0, 1, 1], [], []>} : vector<2x32xf32>, vector<32x128xf32>, vector<2x128xf32> -> vector<2x128xf32>
    %276 = math.tanh %275 : vector<2x128xf32>
    %277 = vector.broadcast %6 : vector<1x128xf32> to vector<2x128xf32>
    %278 = arith.mulf %276, %277 : vector<2x128xf32>
    %cst_169 = arith.constant dense<0.000000e+00> : vector<2xf32>
    %279 = vector.multi_reduction <add>, %278, %cst_169 [1] : vector<2x128xf32> to vector<2xf32>
    %280 = vector.shape_cast %279 : vector<2xf32> to vector<2x1xf32>
    %281 = vector.extract_strided_slice %243 {offsets = [2, 0], sizes = [2, 128], strides = [1, 1]} : vector<16x128xf32> to vector<2x128xf32>
    %282 = arith.addf %242, %281 : vector<2x128xf32>
    %cst_170 = arith.constant dense<0.000000e+00> : vector<2x128xf32>
    %283 = tpu.matmul %270, %2, %cst_170 {dimension_numbers = #tpu.dot_dimension_numbers<[1], [0], [0], [1], [0, 0, 1, 1], [], []>} : vector<2x32xf32>, vector<32x128xf32>, vector<2x128xf32> -> vector<2x128xf32>
    %284 = arith.addf %282, %283 : vector<2x128xf32>
    %285 = arith.negf %284 : vector<2x128xf32>
    %286 = math.exp %285 : vector<2x128xf32>
    %cst_171 = arith.constant 1.000000e+00 : f32
    %287 = vector.broadcast %cst_171 : f32 to vector<2x128xf32>
    %288 = arith.addf %287, %286 : vector<2x128xf32>
    %289 = arith.divf %287, %288 : vector<2x128xf32>
    %290 = vector.extract_strided_slice %289 {offsets = [0, 0], sizes = [2, 32], strides = [1, 1]} : vector<2x128xf32> to vector<2x32xf32>
    %291 = vector.extract_strided_slice %289 {offsets = [0, 32], sizes = [2, 32], strides = [1, 1]} : vector<2x128xf32> to vector<2x32xf32>
    %292 = vector.extract_strided_slice %289 {offsets = [0, 96], sizes = [2, 32], strides = [1, 1]} : vector<2x128xf32> to vector<2x32xf32>
    %293 = vector.extract_strided_slice %289 {offsets = [0, 64], sizes = [2, 32], strides = [1, 1]} : vector<2x128xf32> to vector<2x32xf32>
    %cst_172 = arith.constant 2.000000e+00 : f32
    %294 = vector.broadcast %cst_172 : f32 to vector<2x32xf32>
    %295 = arith.mulf %294, %293 : vector<2x32xf32>
    %cst_173 = arith.constant 1.000000e+00 : f32
    %296 = vector.broadcast %cst_173 : f32 to vector<2x32xf32>
    %297 = arith.subf %295, %296 : vector<2x32xf32>
    %298 = arith.mulf %291, %273 : vector<2x32xf32>
    %299 = arith.mulf %290, %297 : vector<2x32xf32>
    %300 = arith.addf %298, %299 : vector<2x32xf32>
    %301 = math.tanh %300 : vector<2x32xf32>
    %302 = arith.mulf %292, %301 : vector<2x32xf32>
    %303 = arith.subf %302, %270 : vector<2x32xf32>
    %304 = arith.mulf %173, %303 : vector<2x32xf32>
    %305 = arith.addf %270, %304 : vector<2x32xf32>
    %306 = arith.subf %300, %273 : vector<2x32xf32>
    %307 = arith.mulf %173, %306 : vector<2x32xf32>
    %308 = arith.addf %273, %307 : vector<2x32xf32>
    %309 = arith.mulf %173, %302 : vector<2x32xf32>
    %cst_174 = arith.constant dense<0.000000e+00> : vector<2x128xf32>
    %310 = tpu.matmul %309, %4, %cst_174 {dimension_numbers = #tpu.dot_dimension_numbers<[1], [0], [0], [1], [0, 0, 1, 1], [], []>} : vector<2x32xf32>, vector<32x128xf32>, vector<2x128xf32> -> vector<2x128xf32>
    %311 = math.tanh %310 : vector<2x128xf32>
    %312 = vector.broadcast %6 : vector<1x128xf32> to vector<2x128xf32>
    %313 = arith.mulf %311, %312 : vector<2x128xf32>
    %cst_175 = arith.constant dense<0.000000e+00> : vector<2xf32>
    %314 = vector.multi_reduction <add>, %313, %cst_175 [1] : vector<2x128xf32> to vector<2xf32>
    %315 = vector.shape_cast %314 : vector<2xf32> to vector<2x1xf32>
    %316 = vector.extract_strided_slice %243 {offsets = [4, 0], sizes = [2, 128], strides = [1, 1]} : vector<16x128xf32> to vector<2x128xf32>
    %317 = arith.addf %242, %316 : vector<2x128xf32>
    %cst_176 = arith.constant dense<0.000000e+00> : vector<2x128xf32>
    %318 = tpu.matmul %305, %2, %cst_176 {dimension_numbers = #tpu.dot_dimension_numbers<[1], [0], [0], [1], [0, 0, 1, 1], [], []>} : vector<2x32xf32>, vector<32x128xf32>, vector<2x128xf32> -> vector<2x128xf32>
    %319 = arith.addf %317, %318 : vector<2x128xf32>
    %320 = arith.negf %319 : vector<2x128xf32>
    %321 = math.exp %320 : vector<2x128xf32>
    %cst_177 = arith.constant 1.000000e+00 : f32
    %322 = vector.broadcast %cst_177 : f32 to vector<2x128xf32>
    %323 = arith.addf %322, %321 : vector<2x128xf32>
    %324 = arith.divf %322, %323 : vector<2x128xf32>
    %325 = vector.extract_strided_slice %324 {offsets = [0, 0], sizes = [2, 32], strides = [1, 1]} : vector<2x128xf32> to vector<2x32xf32>
    %326 = vector.extract_strided_slice %324 {offsets = [0, 32], sizes = [2, 32], strides = [1, 1]} : vector<2x128xf32> to vector<2x32xf32>
    %327 = vector.extract_strided_slice %324 {offsets = [0, 96], sizes = [2, 32], strides = [1, 1]} : vector<2x128xf32> to vector<2x32xf32>
    %328 = vector.extract_strided_slice %324 {offsets = [0, 64], sizes = [2, 32], strides = [1, 1]} : vector<2x128xf32> to vector<2x32xf32>
    %cst_178 = arith.constant 2.000000e+00 : f32
    %329 = vector.broadcast %cst_178 : f32 to vector<2x32xf32>
    %330 = arith.mulf %329, %328 : vector<2x32xf32>
    %cst_179 = arith.constant 1.000000e+00 : f32
    %331 = vector.broadcast %cst_179 : f32 to vector<2x32xf32>
    %332 = arith.subf %330, %331 : vector<2x32xf32>
    %333 = arith.mulf %326, %308 : vector<2x32xf32>
    %334 = arith.mulf %325, %332 : vector<2x32xf32>
    %335 = arith.addf %333, %334 : vector<2x32xf32>
    %336 = math.tanh %335 : vector<2x32xf32>
    %337 = arith.mulf %327, %336 : vector<2x32xf32>
    %338 = arith.subf %337, %305 : vector<2x32xf32>
    %339 = arith.mulf %184, %338 : vector<2x32xf32>
    %340 = arith.addf %305, %339 : vector<2x32xf32>
    %341 = arith.subf %335, %308 : vector<2x32xf32>
    %342 = arith.mulf %184, %341 : vector<2x32xf32>
    %343 = arith.addf %308, %342 : vector<2x32xf32>
    %344 = arith.mulf %184, %337 : vector<2x32xf32>
    %cst_180 = arith.constant dense<0.000000e+00> : vector<2x128xf32>
    %345 = tpu.matmul %344, %4, %cst_180 {dimension_numbers = #tpu.dot_dimension_numbers<[1], [0], [0], [1], [0, 0, 1, 1], [], []>} : vector<2x32xf32>, vector<32x128xf32>, vector<2x128xf32> -> vector<2x128xf32>
    %346 = math.tanh %345 : vector<2x128xf32>
    %347 = vector.broadcast %6 : vector<1x128xf32> to vector<2x128xf32>
    %348 = arith.mulf %346, %347 : vector<2x128xf32>
    %cst_181 = arith.constant dense<0.000000e+00> : vector<2xf32>
    %349 = vector.multi_reduction <add>, %348, %cst_181 [1] : vector<2x128xf32> to vector<2xf32>
    %350 = vector.shape_cast %349 : vector<2xf32> to vector<2x1xf32>
    %351 = vector.extract_strided_slice %243 {offsets = [6, 0], sizes = [2, 128], strides = [1, 1]} : vector<16x128xf32> to vector<2x128xf32>
    %352 = arith.addf %242, %351 : vector<2x128xf32>
    %cst_182 = arith.constant dense<0.000000e+00> : vector<2x128xf32>
    %353 = tpu.matmul %340, %2, %cst_182 {dimension_numbers = #tpu.dot_dimension_numbers<[1], [0], [0], [1], [0, 0, 1, 1], [], []>} : vector<2x32xf32>, vector<32x128xf32>, vector<2x128xf32> -> vector<2x128xf32>
    %354 = arith.addf %352, %353 : vector<2x128xf32>
    %355 = arith.negf %354 : vector<2x128xf32>
    %356 = math.exp %355 : vector<2x128xf32>
    %cst_183 = arith.constant 1.000000e+00 : f32
    %357 = vector.broadcast %cst_183 : f32 to vector<2x128xf32>
    %358 = arith.addf %357, %356 : vector<2x128xf32>
    %359 = arith.divf %357, %358 : vector<2x128xf32>
    %360 = vector.extract_strided_slice %359 {offsets = [0, 0], sizes = [2, 32], strides = [1, 1]} : vector<2x128xf32> to vector<2x32xf32>
    %361 = vector.extract_strided_slice %359 {offsets = [0, 32], sizes = [2, 32], strides = [1, 1]} : vector<2x128xf32> to vector<2x32xf32>
    %362 = vector.extract_strided_slice %359 {offsets = [0, 96], sizes = [2, 32], strides = [1, 1]} : vector<2x128xf32> to vector<2x32xf32>
    %363 = vector.extract_strided_slice %359 {offsets = [0, 64], sizes = [2, 32], strides = [1, 1]} : vector<2x128xf32> to vector<2x32xf32>
    %cst_184 = arith.constant 2.000000e+00 : f32
    %364 = vector.broadcast %cst_184 : f32 to vector<2x32xf32>
    %365 = arith.mulf %364, %363 : vector<2x32xf32>
    %cst_185 = arith.constant 1.000000e+00 : f32
    %366 = vector.broadcast %cst_185 : f32 to vector<2x32xf32>
    %367 = arith.subf %365, %366 : vector<2x32xf32>
    %368 = arith.mulf %361, %343 : vector<2x32xf32>
    %369 = arith.mulf %360, %367 : vector<2x32xf32>
    %370 = arith.addf %368, %369 : vector<2x32xf32>
    %371 = math.tanh %370 : vector<2x32xf32>
    %372 = arith.mulf %362, %371 : vector<2x32xf32>
    %373 = arith.subf %372, %340 : vector<2x32xf32>
    %374 = arith.mulf %195, %373 : vector<2x32xf32>
    %375 = arith.addf %340, %374 : vector<2x32xf32>
    %376 = arith.subf %370, %343 : vector<2x32xf32>
    %377 = arith.mulf %195, %376 : vector<2x32xf32>
    %378 = arith.addf %343, %377 : vector<2x32xf32>
    %379 = arith.mulf %195, %372 : vector<2x32xf32>
    %cst_186 = arith.constant dense<0.000000e+00> : vector<2x128xf32>
    %380 = tpu.matmul %379, %4, %cst_186 {dimension_numbers = #tpu.dot_dimension_numbers<[1], [0], [0], [1], [0, 0, 1, 1], [], []>} : vector<2x32xf32>, vector<32x128xf32>, vector<2x128xf32> -> vector<2x128xf32>
    %381 = math.tanh %380 : vector<2x128xf32>
    %382 = vector.broadcast %6 : vector<1x128xf32> to vector<2x128xf32>
    %383 = arith.mulf %381, %382 : vector<2x128xf32>
    %cst_187 = arith.constant dense<0.000000e+00> : vector<2xf32>
    %384 = vector.multi_reduction <add>, %383, %cst_187 [1] : vector<2x128xf32> to vector<2xf32>
    %385 = vector.shape_cast %384 : vector<2xf32> to vector<2x1xf32>
    %386 = vector.extract_strided_slice %243 {offsets = [8, 0], sizes = [2, 128], strides = [1, 1]} : vector<16x128xf32> to vector<2x128xf32>
    %387 = arith.addf %242, %386 : vector<2x128xf32>
    %cst_188 = arith.constant dense<0.000000e+00> : vector<2x128xf32>
    %388 = tpu.matmul %375, %2, %cst_188 {dimension_numbers = #tpu.dot_dimension_numbers<[1], [0], [0], [1], [0, 0, 1, 1], [], []>} : vector<2x32xf32>, vector<32x128xf32>, vector<2x128xf32> -> vector<2x128xf32>
    %389 = arith.addf %387, %388 : vector<2x128xf32>
    %390 = arith.negf %389 : vector<2x128xf32>
    %391 = math.exp %390 : vector<2x128xf32>
    %cst_189 = arith.constant 1.000000e+00 : f32
    %392 = vector.broadcast %cst_189 : f32 to vector<2x128xf32>
    %393 = arith.addf %392, %391 : vector<2x128xf32>
    %394 = arith.divf %392, %393 : vector<2x128xf32>
    %395 = vector.extract_strided_slice %394 {offsets = [0, 0], sizes = [2, 32], strides = [1, 1]} : vector<2x128xf32> to vector<2x32xf32>
    %396 = vector.extract_strided_slice %394 {offsets = [0, 32], sizes = [2, 32], strides = [1, 1]} : vector<2x128xf32> to vector<2x32xf32>
    %397 = vector.extract_strided_slice %394 {offsets = [0, 96], sizes = [2, 32], strides = [1, 1]} : vector<2x128xf32> to vector<2x32xf32>
    %398 = vector.extract_strided_slice %394 {offsets = [0, 64], sizes = [2, 32], strides = [1, 1]} : vector<2x128xf32> to vector<2x32xf32>
    %cst_190 = arith.constant 2.000000e+00 : f32
    %399 = vector.broadcast %cst_190 : f32 to vector<2x32xf32>
    %400 = arith.mulf %399, %398 : vector<2x32xf32>
    %cst_191 = arith.constant 1.000000e+00 : f32
    %401 = vector.broadcast %cst_191 : f32 to vector<2x32xf32>
    %402 = arith.subf %400, %401 : vector<2x32xf32>
    %403 = arith.mulf %396, %378 : vector<2x32xf32>
    %404 = arith.mulf %395, %402 : vector<2x32xf32>
    %405 = arith.addf %403, %404 : vector<2x32xf32>
    %406 = math.tanh %405 : vector<2x32xf32>
    %407 = arith.mulf %397, %406 : vector<2x32xf32>
    %408 = arith.subf %407, %375 : vector<2x32xf32>
    %409 = arith.mulf %206, %408 : vector<2x32xf32>
    %410 = arith.addf %375, %409 : vector<2x32xf32>
    %411 = arith.subf %405, %378 : vector<2x32xf32>
    %412 = arith.mulf %206, %411 : vector<2x32xf32>
    %413 = arith.addf %378, %412 : vector<2x32xf32>
    %414 = arith.mulf %206, %407 : vector<2x32xf32>
    %cst_192 = arith.constant dense<0.000000e+00> : vector<2x128xf32>
    %415 = tpu.matmul %414, %4, %cst_192 {dimension_numbers = #tpu.dot_dimension_numbers<[1], [0], [0], [1], [0, 0, 1, 1], [], []>} : vector<2x32xf32>, vector<32x128xf32>, vector<2x128xf32> -> vector<2x128xf32>
    %416 = math.tanh %415 : vector<2x128xf32>
    %417 = vector.broadcast %6 : vector<1x128xf32> to vector<2x128xf32>
    %418 = arith.mulf %416, %417 : vector<2x128xf32>
    %cst_193 = arith.constant dense<0.000000e+00> : vector<2xf32>
    %419 = vector.multi_reduction <add>, %418, %cst_193 [1] : vector<2x128xf32> to vector<2xf32>
    %420 = vector.shape_cast %419 : vector<2xf32> to vector<2x1xf32>
    %421 = vector.extract_strided_slice %243 {offsets = [10, 0], sizes = [2, 128], strides = [1, 1]} : vector<16x128xf32> to vector<2x128xf32>
    %422 = arith.addf %242, %421 : vector<2x128xf32>
    %cst_194 = arith.constant dense<0.000000e+00> : vector<2x128xf32>
    %423 = tpu.matmul %410, %2, %cst_194 {dimension_numbers = #tpu.dot_dimension_numbers<[1], [0], [0], [1], [0, 0, 1, 1], [], []>} : vector<2x32xf32>, vector<32x128xf32>, vector<2x128xf32> -> vector<2x128xf32>
    %424 = arith.addf %422, %423 : vector<2x128xf32>
    %425 = arith.negf %424 : vector<2x128xf32>
    %426 = math.exp %425 : vector<2x128xf32>
    %cst_195 = arith.constant 1.000000e+00 : f32
    %427 = vector.broadcast %cst_195 : f32 to vector<2x128xf32>
    %428 = arith.addf %427, %426 : vector<2x128xf32>
    %429 = arith.divf %427, %428 : vector<2x128xf32>
    %430 = vector.extract_strided_slice %429 {offsets = [0, 0], sizes = [2, 32], strides = [1, 1]} : vector<2x128xf32> to vector<2x32xf32>
    %431 = vector.extract_strided_slice %429 {offsets = [0, 32], sizes = [2, 32], strides = [1, 1]} : vector<2x128xf32> to vector<2x32xf32>
    %432 = vector.extract_strided_slice %429 {offsets = [0, 96], sizes = [2, 32], strides = [1, 1]} : vector<2x128xf32> to vector<2x32xf32>
    %433 = vector.extract_strided_slice %429 {offsets = [0, 64], sizes = [2, 32], strides = [1, 1]} : vector<2x128xf32> to vector<2x32xf32>
    %cst_196 = arith.constant 2.000000e+00 : f32
    %434 = vector.broadcast %cst_196 : f32 to vector<2x32xf32>
    %435 = arith.mulf %434, %433 : vector<2x32xf32>
    %cst_197 = arith.constant 1.000000e+00 : f32
    %436 = vector.broadcast %cst_197 : f32 to vector<2x32xf32>
    %437 = arith.subf %435, %436 : vector<2x32xf32>
    %438 = arith.mulf %431, %413 : vector<2x32xf32>
    %439 = arith.mulf %430, %437 : vector<2x32xf32>
    %440 = arith.addf %438, %439 : vector<2x32xf32>
    %441 = math.tanh %440 : vector<2x32xf32>
    %442 = arith.mulf %432, %441 : vector<2x32xf32>
    %443 = arith.subf %442, %410 : vector<2x32xf32>
    %444 = arith.mulf %217, %443 : vector<2x32xf32>
    %445 = arith.addf %410, %444 : vector<2x32xf32>
    %446 = arith.subf %440, %413 : vector<2x32xf32>
    %447 = arith.mulf %217, %446 : vector<2x32xf32>
    %448 = arith.addf %413, %447 : vector<2x32xf32>
    %449 = arith.mulf %217, %442 : vector<2x32xf32>
    %cst_198 = arith.constant dense<0.000000e+00> : vector<2x128xf32>
    %450 = tpu.matmul %449, %4, %cst_198 {dimension_numbers = #tpu.dot_dimension_numbers<[1], [0], [0], [1], [0, 0, 1, 1], [], []>} : vector<2x32xf32>, vector<32x128xf32>, vector<2x128xf32> -> vector<2x128xf32>
    %451 = math.tanh %450 : vector<2x128xf32>
    %452 = vector.broadcast %6 : vector<1x128xf32> to vector<2x128xf32>
    %453 = arith.mulf %451, %452 : vector<2x128xf32>
    %cst_199 = arith.constant dense<0.000000e+00> : vector<2xf32>
    %454 = vector.multi_reduction <add>, %453, %cst_199 [1] : vector<2x128xf32> to vector<2xf32>
    %455 = vector.shape_cast %454 : vector<2xf32> to vector<2x1xf32>
    %456 = vector.extract_strided_slice %243 {offsets = [12, 0], sizes = [2, 128], strides = [1, 1]} : vector<16x128xf32> to vector<2x128xf32>
    %457 = arith.addf %242, %456 : vector<2x128xf32>
    %cst_200 = arith.constant dense<0.000000e+00> : vector<2x128xf32>
    %458 = tpu.matmul %445, %2, %cst_200 {dimension_numbers = #tpu.dot_dimension_numbers<[1], [0], [0], [1], [0, 0, 1, 1], [], []>} : vector<2x32xf32>, vector<32x128xf32>, vector<2x128xf32> -> vector<2x128xf32>
    %459 = arith.addf %457, %458 : vector<2x128xf32>
    %460 = arith.negf %459 : vector<2x128xf32>
    %461 = math.exp %460 : vector<2x128xf32>
    %cst_201 = arith.constant 1.000000e+00 : f32
    %462 = vector.broadcast %cst_201 : f32 to vector<2x128xf32>
    %463 = arith.addf %462, %461 : vector<2x128xf32>
    %464 = arith.divf %462, %463 : vector<2x128xf32>
    %465 = vector.extract_strided_slice %464 {offsets = [0, 0], sizes = [2, 32], strides = [1, 1]} : vector<2x128xf32> to vector<2x32xf32>
    %466 = vector.extract_strided_slice %464 {offsets = [0, 32], sizes = [2, 32], strides = [1, 1]} : vector<2x128xf32> to vector<2x32xf32>
    %467 = vector.extract_strided_slice %464 {offsets = [0, 96], sizes = [2, 32], strides = [1, 1]} : vector<2x128xf32> to vector<2x32xf32>
    %468 = vector.extract_strided_slice %464 {offsets = [0, 64], sizes = [2, 32], strides = [1, 1]} : vector<2x128xf32> to vector<2x32xf32>
    %cst_202 = arith.constant 2.000000e+00 : f32
    %469 = vector.broadcast %cst_202 : f32 to vector<2x32xf32>
    %470 = arith.mulf %469, %468 : vector<2x32xf32>
    %cst_203 = arith.constant 1.000000e+00 : f32
    %471 = vector.broadcast %cst_203 : f32 to vector<2x32xf32>
    %472 = arith.subf %470, %471 : vector<2x32xf32>
    %473 = arith.mulf %466, %448 : vector<2x32xf32>
    %474 = arith.mulf %465, %472 : vector<2x32xf32>
    %475 = arith.addf %473, %474 : vector<2x32xf32>
    %476 = math.tanh %475 : vector<2x32xf32>
    %477 = arith.mulf %467, %476 : vector<2x32xf32>
    %478 = arith.subf %477, %445 : vector<2x32xf32>
    %479 = arith.mulf %228, %478 : vector<2x32xf32>
    %480 = arith.addf %445, %479 : vector<2x32xf32>
    %481 = arith.subf %475, %448 : vector<2x32xf32>
    %482 = arith.mulf %228, %481 : vector<2x32xf32>
    %483 = arith.addf %448, %482 : vector<2x32xf32>
    %484 = arith.mulf %228, %477 : vector<2x32xf32>
    %cst_204 = arith.constant dense<0.000000e+00> : vector<2x128xf32>
    %485 = tpu.matmul %484, %4, %cst_204 {dimension_numbers = #tpu.dot_dimension_numbers<[1], [0], [0], [1], [0, 0, 1, 1], [], []>} : vector<2x32xf32>, vector<32x128xf32>, vector<2x128xf32> -> vector<2x128xf32>
    %486 = math.tanh %485 : vector<2x128xf32>
    %487 = vector.broadcast %6 : vector<1x128xf32> to vector<2x128xf32>
    %488 = arith.mulf %486, %487 : vector<2x128xf32>
    %cst_205 = arith.constant dense<0.000000e+00> : vector<2xf32>
    %489 = vector.multi_reduction <add>, %488, %cst_205 [1] : vector<2x128xf32> to vector<2xf32>
    %490 = vector.shape_cast %489 : vector<2xf32> to vector<2x1xf32>
    %491 = vector.extract_strided_slice %243 {offsets = [14, 0], sizes = [2, 128], strides = [1, 1]} : vector<16x128xf32> to vector<2x128xf32>
    %492 = arith.addf %242, %491 : vector<2x128xf32>
    %cst_206 = arith.constant dense<0.000000e+00> : vector<2x128xf32>
    %493 = tpu.matmul %480, %2, %cst_206 {dimension_numbers = #tpu.dot_dimension_numbers<[1], [0], [0], [1], [0, 0, 1, 1], [], []>} : vector<2x32xf32>, vector<32x128xf32>, vector<2x128xf32> -> vector<2x128xf32>
    %494 = arith.addf %492, %493 : vector<2x128xf32>
    %495 = arith.negf %494 : vector<2x128xf32>
    %496 = math.exp %495 : vector<2x128xf32>
    %cst_207 = arith.constant 1.000000e+00 : f32
    %497 = vector.broadcast %cst_207 : f32 to vector<2x128xf32>
    %498 = arith.addf %497, %496 : vector<2x128xf32>
    %499 = arith.divf %497, %498 : vector<2x128xf32>
    %500 = vector.extract_strided_slice %499 {offsets = [0, 0], sizes = [2, 32], strides = [1, 1]} : vector<2x128xf32> to vector<2x32xf32>
    %501 = vector.extract_strided_slice %499 {offsets = [0, 32], sizes = [2, 32], strides = [1, 1]} : vector<2x128xf32> to vector<2x32xf32>
    %502 = vector.extract_strided_slice %499 {offsets = [0, 96], sizes = [2, 32], strides = [1, 1]} : vector<2x128xf32> to vector<2x32xf32>
    %503 = vector.extract_strided_slice %499 {offsets = [0, 64], sizes = [2, 32], strides = [1, 1]} : vector<2x128xf32> to vector<2x32xf32>
    %cst_208 = arith.constant 2.000000e+00 : f32
    %504 = vector.broadcast %cst_208 : f32 to vector<2x32xf32>
    %505 = arith.mulf %504, %503 : vector<2x32xf32>
    %cst_209 = arith.constant 1.000000e+00 : f32
    %506 = vector.broadcast %cst_209 : f32 to vector<2x32xf32>
    %507 = arith.subf %505, %506 : vector<2x32xf32>
    %508 = arith.mulf %501, %483 : vector<2x32xf32>
    %509 = arith.mulf %500, %507 : vector<2x32xf32>
    %510 = arith.addf %508, %509 : vector<2x32xf32>
    %511 = math.tanh %510 : vector<2x32xf32>
    %512 = arith.mulf %502, %511 : vector<2x32xf32>
    %513 = arith.subf %512, %480 : vector<2x32xf32>
    %514 = arith.mulf %239, %513 : vector<2x32xf32>
    %515 = arith.addf %480, %514 : vector<2x32xf32>
    %516 = arith.mulf %239, %512 : vector<2x32xf32>
    %cst_210 = arith.constant dense<0.000000e+00> : vector<2x128xf32>
    %517 = tpu.matmul %516, %4, %cst_210 {dimension_numbers = #tpu.dot_dimension_numbers<[1], [0], [0], [1], [0, 0, 1, 1], [], []>} : vector<2x32xf32>, vector<32x128xf32>, vector<2x128xf32> -> vector<2x128xf32>
    %518 = math.tanh %517 : vector<2x128xf32>
    %519 = vector.broadcast %6 : vector<1x128xf32> to vector<2x128xf32>
    %520 = arith.mulf %518, %519 : vector<2x128xf32>
    %cst_211 = arith.constant dense<0.000000e+00> : vector<2xf32>
    %521 = vector.multi_reduction <add>, %520, %cst_211 [1] : vector<2x128xf32> to vector<2xf32>
    %522 = vector.shape_cast %521 : vector<2xf32> to vector<2x1xf32>
    %cst_212 = arith.constant dense<0.000000e+00> : vector<2x128xf32>
    %523 = tpu.matmul %86, %5, %cst_212 {dimension_numbers = #tpu.dot_dimension_numbers<[1], [0], [0], [1], [0, 0, 1, 1], [], []>} : vector<2x128xf32>, vector<128x128xf32>, vector<2x128xf32> -> vector<2x128xf32>
    %524 = math.tanh %523 : vector<2x128xf32>
    %525 = vector.broadcast %7 : vector<1x128xf32> to vector<2x128xf32>
    %526 = arith.mulf %524, %525 : vector<2x128xf32>
    %cst_213 = arith.constant dense<0.000000e+00> : vector<2xf32>
    %527 = vector.multi_reduction <add>, %526, %cst_213 [1] : vector<2x128xf32> to vector<2xf32>
    %528 = vector.shape_cast %527 : vector<2xf32> to vector<2x1xf32>
    %529 = tpu.concatenate %280, %315, %350, %385, %420, %455, %490, %522 in 1 : vector<2x1xf32>, vector<2x1xf32>, vector<2x1xf32>, vector<2x1xf32>, vector<2x1xf32>, vector<2x1xf32>, vector<2x1xf32>, vector<2x1xf32> -> vector<2x8xf32>
    %530 = vector.broadcast %528 : vector<2x1xf32> to vector<2x8xf32>
    %531 = arith.addf %529, %530 : vector<2x8xf32>
    %cst_214 = arith.constant dense<0xFF800000> : vector<2xf32>
    %532 = vector.multi_reduction <maximumf>, %531, %cst_214 [1] : vector<2x8xf32> to vector<2xf32>
    %533 = vector.shape_cast %532 : vector<2xf32> to vector<2x1xf32>
    %534 = vector.broadcast %533 : vector<2x1xf32> to vector<2x8xf32>
    %535 = arith.subf %531, %534 : vector<2x8xf32>
    %536 = math.exp %535 : vector<2x8xf32>
    %cst_215 = arith.constant dense<0.000000e+00> : vector<2xf32>
    %537 = vector.multi_reduction <add>, %536, %cst_215 [1] : vector<2x8xf32> to vector<2xf32>
    %538 = vector.shape_cast %537 : vector<2xf32> to vector<2x1xf32>
    %539 = tpu.reciprocal %538 : vector<2x1xf32> -> vector<2x1xf32>
    %540 = vector.broadcast %539 : vector<2x1xf32> to vector<2x8xf32>
    %541 = arith.mulf %536, %540 : vector<2x8xf32>
    %cst_216 = arith.constant 0.000000e+00 : f32
    %542 = vector.broadcast %cst_216 : f32 to vector<2x32xf32>
    %543 = vector.extract_strided_slice %541 {offsets = [0, 0], sizes = [2, 1], strides = [1, 1]} : vector<2x8xf32> to vector<2x1xf32>
    %544 = vector.broadcast %543 : vector<2x1xf32> to vector<2x32xf32>
    %545 = arith.mulf %544, %274 : vector<2x32xf32>
    %546 = arith.addf %542, %545 : vector<2x32xf32>
    %547 = vector.extract_strided_slice %541 {offsets = [0, 1], sizes = [2, 1], strides = [1, 1]} : vector<2x8xf32> to vector<2x1xf32>
    %548 = vector.broadcast %547 : vector<2x1xf32> to vector<2x32xf32>
    %549 = arith.mulf %548, %309 : vector<2x32xf32>
    %550 = arith.addf %546, %549 : vector<2x32xf32>
    %551 = vector.extract_strided_slice %541 {offsets = [0, 2], sizes = [2, 1], strides = [1, 1]} : vector<2x8xf32> to vector<2x1xf32>
    %552 = vector.broadcast %551 : vector<2x1xf32> to vector<2x32xf32>
    %553 = arith.mulf %552, %344 : vector<2x32xf32>
    %554 = arith.addf %550, %553 : vector<2x32xf32>
    %555 = vector.extract_strided_slice %541 {offsets = [0, 3], sizes = [2, 1], strides = [1, 1]} : vector<2x8xf32> to vector<2x1xf32>
    %556 = vector.broadcast %555 : vector<2x1xf32> to vector<2x32xf32>
    %557 = arith.mulf %556, %379 : vector<2x32xf32>
    %558 = arith.addf %554, %557 : vector<2x32xf32>
    %559 = vector.extract_strided_slice %541 {offsets = [0, 4], sizes = [2, 1], strides = [1, 1]} : vector<2x8xf32> to vector<2x1xf32>
    %560 = vector.broadcast %559 : vector<2x1xf32> to vector<2x32xf32>
    %561 = arith.mulf %560, %414 : vector<2x32xf32>
    %562 = arith.addf %558, %561 : vector<2x32xf32>
    %563 = vector.extract_strided_slice %541 {offsets = [0, 5], sizes = [2, 1], strides = [1, 1]} : vector<2x8xf32> to vector<2x1xf32>
    %564 = vector.broadcast %563 : vector<2x1xf32> to vector<2x32xf32>
    %565 = arith.mulf %564, %449 : vector<2x32xf32>
    %566 = arith.addf %562, %565 : vector<2x32xf32>
    %567 = vector.extract_strided_slice %541 {offsets = [0, 6], sizes = [2, 1], strides = [1, 1]} : vector<2x8xf32> to vector<2x1xf32>
    %568 = vector.broadcast %567 : vector<2x1xf32> to vector<2x32xf32>
    %569 = arith.mulf %568, %484 : vector<2x32xf32>
    %570 = arith.addf %566, %569 : vector<2x32xf32>
    %571 = vector.extract_strided_slice %541 {offsets = [0, 7], sizes = [2, 1], strides = [1, 1]} : vector<2x8xf32> to vector<2x1xf32>
    %572 = vector.broadcast %571 : vector<2x1xf32> to vector<2x32xf32>
    %573 = arith.mulf %572, %516 : vector<2x32xf32>
    %574 = arith.addf %570, %573 : vector<2x32xf32>
    %cst_217 = arith.constant dense<0.000000e+00> : vector<2x128xf32>
    %575 = tpu.matmul %574, %8, %cst_217 {dimension_numbers = #tpu.dot_dimension_numbers<[1], [0], [0], [1], [0, 0, 1, 1], [], []>} : vector<2x32xf32>, vector<32x128xf32>, vector<2x128xf32> -> vector<2x128xf32>
    %cst_218 = arith.constant dense<0.000000e+00> : vector<2x128xf32>
    %576 = tpu.matmul %515, %9, %cst_218 {dimension_numbers = #tpu.dot_dimension_numbers<[1], [0], [0], [1], [0, 0, 1, 1], [], []>} : vector<2x32xf32>, vector<32x128xf32>, vector<2x128xf32> -> vector<2x128xf32>
    %577 = arith.addf %575, %576 : vector<2x128xf32>
    %578 = math.tanh %577 : vector<2x128xf32>
    %cst_219 = arith.constant dense<0.000000e+00> : vector<2x128xf32>
    %579 = tpu.matmul %578, %10, %cst_219 {dimension_numbers = #tpu.dot_dimension_numbers<[1], [0], [0], [1], [0, 0, 1, 1], [], []>} : vector<2x128xf32>, vector<128x128xf32>, vector<2x128xf32> -> vector<2x128xf32>
    %580 = vector.broadcast %11 : vector<1x128xf32> to vector<2x128xf32>
    %581 = arith.addf %579, %580 : vector<2x128xf32>
    %c0_220 = arith.constant 0 : index
    %c0_221 = arith.constant 0 : index
    %582 = vector.load %arg4[%c0_220, %c0_221] : memref<2x128xf32, #tpu.memory_space<vmem>>, vector<2x128xf32>
    tpu.vector_store %arg4[%c0_220, %c0_221], %581 {strides = array<i32>} : memref<2x128xf32, #tpu.memory_space<vmem>>, vector<2x128xf32>,
    return
  }
}

</mosaic_0001>

<llo_original>
// kernel: atae_lstm_forward.1
$region0: #{atae_lstm_forward.1}
  #allocation0 [shape = 'u32[]', space=smem, size = 0x4, offset = 0x4, fixed_abs, tag = 'smem constant byte address 0x4 - core index']
  #allocation1 [shape = 'u32[72,128]{1,0:T(1,128)}', space=vmem, size = 0x9000, scoped, tag = 'internal scratch']
  %s0 = inlined_call_operand.hbm [shape: f32[672,128], index: 0, kind: input, shape index: {}]
  %s1 = inlined_call_operand.hbm [shape: f32[50,1,128], index: 1, kind: input, shape index: {}]
  %s2 = inlined_call_operand.hbm [shape: s32[2,8], index: 2, kind: input, shape index: {}]
  %s3 = inlined_call_operand.hbm [shape: s32[2,4], index: 3, kind: input, shape index: {}]
  %s4 = inlined_call_operand.hbm [shape: f32[2,128], index: 4, kind: output, shape index: {}]
  %s5 = sld [smem:[#allocation0]]
  $region42: #{atae_lstm_forward.1} parent=0
    _
  %s7 = ssub.s32 1, %s5
  %s8 = scalar_select 0, %s7, %s5
  $region1: #{atae_lstm_forward.1} parent=0
    #allocation2 [shape = 'u8[344064]{0}', space=vmem, size = 0x54000, scoped, tag = 'input window, operand 0, single buffered']
    #allocation3 [shape = 's32[1]{0}', space=sflag, size = 0x4, scoped, tag = 'scoped memory for atae_lstm_forward.1']
    #allocation4 [shape = 's32[1]{0}', space=sflag, size = 0x4, scoped, tag = 'scoped memory for atae_lstm_forward.1']
    #allocation5 [shape = 's32[1]{0}', space=sflag, size = 0x4, scoped, tag = 'scoped memory for atae_lstm_forward.1']
    #allocation6 [shape = 'u8[25600]{0}', space=vmem, size = 0x6400, scoped, tag = 'input window, operand 1, single buffered']
    #allocation7 [shape = 's32[1]{0}', space=sflag, size = 0x4, scoped, tag = 'scoped memory for atae_lstm_forward.1']
    #allocation8 [shape = 'u8[1024]{0}', space=smem, size = 0x400, scoped, tag = 'input window, operand 2, single buffered']
    #allocation9 [shape = 'u8[1024]{0}', space=smem, size = 0x400, scoped, tag = 'input window, operand 3, single buffered']
    #allocation10 [shape = 's32[1]{0}', space=sflag, size = 0x4, scoped, tag = 'scoped memory for atae_lstm_forward.1']
    #allocation11 [shape = 'u8[1024]{0}', space=vmem, size = 0x400, scoped, tag = 'output window, operand 0, single buffered']
    %9 = vsyncpa [#allocation3], 0
    %10 = vsyncpa [#allocation7], 0
    %11 = vsyncpa [#allocation5], 0
    %12 = vsyncpa [#allocation10], 0
    %13 = vsyncpa [#allocation4], 0
    // Predicated region
    $region2: #{atae_lstm_forward.1} parent=1 // pred_check
      _
    $region3: #{atae_lstm_forward.1} parent=1 // pred_check_branch
      %15 = sbr.rel (0) target = $region5
    $region4: #{atae_lstm_forward.1} parent=1 // pred_region
      %17 = vsyncadd [#allocation3], 0
      %s18 = sshll.u32 %s0, 4
      %s19 = int_to_ptr.hbm [resolvable:$true] %s18
      %s20 = sshll.u32 [#allocation2], 4
      %s21 = int_to_ptr.vmem [resolvable:$true] %s20
      %26 = dma.hbm_to_vmem [thread:$0]  %s19, 10752, %s21, [#allocation3], 128, 128, 8
    $region5: #{atae_lstm_forward.1} parent=1 // pred_fallthru
      _
    // Predicated region
    $region6: #{atae_lstm_forward.1} parent=1 // pred_check
      _
    $region7: #{atae_lstm_forward.1} parent=1 // pred_check_branch
      %28 = sbr.rel (0) target = $region9
    $region8: #{atae_lstm_forward.1} parent=1 // pred_region
      %30 = vsyncadd [#allocation7], 0
      %s31 = sshll.u32 %s1, 4
      %s32 = int_to_ptr.hbm [resolvable:$true] %s31
      %s33 = sshll.u32 [#allocation6], 4
      %s34 = int_to_ptr.vmem [resolvable:$true] %s33
      %39 = dma.hbm_to_vmem [thread:$0]  %s32, 800, %s34, [#allocation7], 16, 16, 1
    $region9: #{atae_lstm_forward.1} parent=1 // pred_fallthru
      _
    // Predicated region
    $region10: #{atae_lstm_forward.1} parent=1 // pred_check
      _
    $region11: #{atae_lstm_forward.1} parent=1 // pred_check_branch
      %41 = sbr.rel (0) target = $region13
    $region12: #{atae_lstm_forward.1} parent=1 // pred_region
      %43 = vsyncadd [#allocation5], 0
      %s45 = sshll.u32 %s2, 4
      %s46 = int_to_ptr.hbm [resolvable:$true] %s45
      %48 = dma.hbm_to_smem %s46, 32, [#allocation8], [#allocation5]
    $region13: #{atae_lstm_forward.1} parent=1 // pred_fallthru
      _
    // Predicated region
    $region14: #{atae_lstm_forward.1} parent=1 // pred_check
      _
    $region15: #{atae_lstm_forward.1} parent=1 // pred_check_branch
      %50 = sbr.rel (0) target = $region17
    $region16: #{atae_lstm_forward.1} parent=1 // pred_region
      %52 = vsyncadd [#allocation10], 0
      %s54 = sshll.u32 %s3, 4
      %s55 = int_to_ptr.hbm [resolvable:$true] %s54
      %57 = dma.hbm_to_smem %s55, 32, [#allocation9], [#allocation10]
    $region17: #{atae_lstm_forward.1} parent=1 // pred_fallthru
      _
    // Predicated region
    $region18: #{atae_lstm_forward.1} parent=1 // pred_check
      _
    $region19: #{atae_lstm_forward.1} parent=1 // pred_check_branch
      %59 = sbr.rel (0) target = $region21
    $region20: #{atae_lstm_forward.1} parent=1 // pred_region
      %61 = dma.done [#allocation3], 10752
    $region21: #{atae_lstm_forward.1} parent=1 // pred_fallthru
      _
    // Predicated region
    $region22: #{atae_lstm_forward.1} parent=1 // pred_check
      _
    $region23: #{atae_lstm_forward.1} parent=1 // pred_check_branch
      %63 = sbr.rel (0) target = $region25
    $region24: #{atae_lstm_forward.1} parent=1 // pred_region
      %65 = dma.done [#allocation7], 800
    $region25: #{atae_lstm_forward.1} parent=1 // pred_fallthru
      _
    // Predicated region
    $region26: #{atae_lstm_forward.1} parent=1 // pred_check
      _
    $region27: #{atae_lstm_forward.1} parent=1 // pred_check_branch
      %67 = sbr.rel (0) target = $region29
    $region28: #{atae_lstm_forward.1} parent=1 // pred_region
      %69 = dma.done [#allocation5], 32
    $region29: #{atae_lstm_forward.1} parent=1 // pred_fallthru
      _
    // Predicated region
    $region30: #{atae_lstm_forward.1} parent=1 // pred_check
      _
    $region31: #{atae_lstm_forward.1} parent=1 // pred_check_branch
      %71 = sbr.rel (0) target = $region33
    $region32: #{atae_lstm_forward.1} parent=1 // pred_region
      %73 = dma.done [#allocation10], 32
    $region33: #{atae_lstm_forward.1} parent=1 // pred_fallthru
      _
    %74 = sfence
    %v75 = vld [vmem:[#allocation2] sm:$0xff]
    %v76 = vld [vmem:[#allocation2 + $0x8] sm:$0xff]
    %v77 = vld [vmem:[#allocation2 + $0x10] sm:$0xff]
    %v78 = vld [vmem:[#allocation2 + $0x18] sm:$0xff]
    %v79 = vld [vmem:[#allocation2 + $0x20] sm:$0xff]
    %v80 = vld [vmem:[#allocation2 + $0x28] sm:$0xff]
    %v81 = vld [vmem:[#allocation2 + $0x30] sm:$0xff]
    %v82 = vld [vmem:[#allocation2 + $0x38] sm:$0xff]
    %v83 = vld [vmem:[#allocation2 + $0x40] sm:$0xff]
    %v84 = vld [vmem:[#allocation2 + $0x48] sm:$0xff]
    %v85 = vld [vmem:[#allocation2 + $0x50] sm:$0xff]
    %v86 = vld [vmem:[#allocation2 + $0x58] sm:$0xff]
    %v87 = vld [vmem:[#allocation2 + $0x60] sm:$0xff]
    %v88 = vld [vmem:[#allocation2 + $0x68] sm:$0xff]
    %v89 = vld [vmem:[#allocation2 + $0x70] sm:$0xff]
    %v90 = vld [vmem:[#allocation2 + $0x78] sm:$0xff]
    %v91 = vld [vmem:[#allocation2 + $0x80] sm:$0xff]
    %v92 = vld [vmem:[#allocation2 + $0x88] sm:$0xff]
    %v93 = vld [vmem:[#allocation2 + $0x90] sm:$0xff]
    %v94 = vld [vmem:[#allocation2 + $0x98] sm:$0xff]
    %v95 = vld [vmem:[#allocation2 + $0xa0] sm:$0xff]
    %v96 = vld [vmem:[#allocation2 + $0xa8] sm:$0xff]
    %v97 = vld [vmem:[#allocation2 + $0xb0] sm:$0xff]
    %v98 = vld [vmem:[#allocation2 + $0xb8] sm:$0xff]
    %v99 = vld [vmem:[#allocation2 + $0xc0] sm:$0xff]
    %v100 = vld [vmem:[#allocation2 + $0xc8] sm:$0xff]
    %v101 = vld [vmem:[#allocation2 + $0xd0] sm:$0xff]
    %v102 = vld [vmem:[#allocation2 + $0xd8] sm:$0xff]
    %v103 = vld [vmem:[#allocation2 + $0xe0] sm:$0xff]
    %v104 = vld [vmem:[#allocation2 + $0xe8] sm:$0xff]
    %v105 = vld [vmem:[#allocation2 + $0xf0] sm:$0xff]
    %v106 = vld [vmem:[#allocation2 + $0xf8] sm:$0xff]
    %v107 = vld [vmem:[#allocation2 + $0x100] sm:$0xff]
    %v108 = vld [vmem:[#allocation2 + $0x108] sm:$0xff]
    %v109 = vld [vmem:[#allocation2 + $0x110] sm:$0xff]
    %v110 = vld [vmem:[#allocation2 + $0x118] sm:$0xff]
    %v111 = vld [vmem:[#allocation2 + $0x120] sm:$0x1]
    %v112 = vld [vmem:[#allocation2 + $0x128] sm:$0xff]
    %v113 = vld [vmem:[#allocation2 + $0x130] sm:$0xff]
    %v114 = vld [vmem:[#allocation2 + $0x138] sm:$0xff]
    %v115 = vld [vmem:[#allocation2 + $0x140] sm:$0xff]
    %v116 = vld [vmem:[#allocation2 + $0x148] sm:$0xff]
    %v117 = vld [vmem:[#allocation2 + $0x150] sm:$0xff]
    %v118 = vld [vmem:[#allocation2 + $0x158] sm:$0xff]
    %v119 = vld [vmem:[#allocation2 + $0x160] sm:$0xff]
    %v120 = vld [vmem:[#allocation2 + $0x168] sm:$0xff]
    %v121 = vld [vmem:[#allocation2 + $0x170] sm:$0xff]
    %v122 = vld [vmem:[#allocation2 + $0x178] sm:$0xff]
    %v123 = vld [vmem:[#allocation2 + $0x180] sm:$0xff]
    %v124 = vld [vmem:[#allocation2 + $0x188] sm:$0xff]
    %v125 = vld [vmem:[#allocation2 + $0x190] sm:$0xff]
    %v126 = vld [vmem:[#allocation2 + $0x198] sm:$0xff]
    %v127 = vld [vmem:[#allocation2 + $0x1a0] sm:$0xff]
    %v128 = vld [vmem:[#allocation2 + $0x1a8] sm:$0xff]
    %v129 = vld [vmem:[#allocation2 + $0x1b0] sm:$0xff]
    %v130 = vld [vmem:[#allocation2 + $0x1b8] sm:$0xff]
    %v131 = vld [vmem:[#allocation2 + $0x1c0] sm:$0xff]
    %v132 = vld [vmem:[#allocation2 + $0x1c8] sm:$0x1]
    %v133 = vld [vmem:[#allocation2 + $0x1d0] sm:$0x1]
    %v134 = vld [vmem:[#allocation2 + $0x1d8] sm:$0xff]
    %v135 = vld [vmem:[#allocation2 + $0x1e0] sm:$0xff]
    %v136 = vld [vmem:[#allocation2 + $0x1e8] sm:$0xff]
    %v137 = vld [vmem:[#allocation2 + $0x1f0] sm:$0xff]
    %v138 = vld [vmem:[#allocation2 + $0x1f8] sm:$0xff]
    %v139 = vld [vmem:[#allocation2 + $0x200] sm:$0xff]
    %v140 = vld [vmem:[#allocation2 + $0x208] sm:$0xff]
    %v141 = vld [vmem:[#allocation2 + $0x210] sm:$0xff]
    %v142 = vld [vmem:[#allocation2 + $0x218] sm:$0xff]
    %v143 = vld [vmem:[#allocation2 + $0x220] sm:$0xff]
    %v144 = vld [vmem:[#allocation2 + $0x228] sm:$0xff]
    %v145 = vld [vmem:[#allocation2 + $0x230] sm:$0xff]
    %v146 = vld [vmem:[#allocation2 + $0x238] sm:$0xff]
    %v147 = vld [vmem:[#allocation2 + $0x240] sm:$0xff]
    %v148 = vld [vmem:[#allocation2 + $0x248] sm:$0xff]
    %v149 = vld [vmem:[#allocation2 + $0x250] sm:$0xff]
    %v150 = vld [vmem:[#allocation2 + $0x258] sm:$0xff]
    %v151 = vld [vmem:[#allocation2 + $0x260] sm:$0xff]
    %v152 = vld [vmem:[#allocation2 + $0x268] sm:$0xff]
    %v153 = vld [vmem:[#allocation2 + $0x270] sm:$0xff]
    %v154 = vld [vmem:[#allocation2 + $0x278] sm:$0xff]
    %v155 = vld [vmem:[#allocation2 + $0x280] sm:$0xff]
    %v156 = vld [vmem:[#allocation2 + $0x288] sm:$0xff]
    %v157 = vld [vmem:[#allocation2 + $0x290] sm:$0xff]
    %v158 = vld [vmem:[#allocation2 + $0x298] sm:$0x1]
    %s159 = sld [smem:[#allocation9]]
    %s160 = scalar_lea.vmem [#allocation6], %s159
    %v161 = vld [vmem:[%s160] sm:$0x1]
    %v162 = vadd.f32 %v161, 0.0
    %p163 = scmp.ne.s32.totalorder %s159, 0
    %s164 = scalar_select %p163, 1, 0
    %s165 = sld [smem:[#allocation9 + $0x1]]
    %s166 = scalar_lea.vmem [#allocation6], %s165
    %v167 = vld [vmem:[%s166] sm:$0x1]
    %v168 = vadd.f32 %v162, %v167
    %p169 = scmp.ne.s32.totalorder %s165, 0
    %s170 = scalar_select %p169, 1, 0
    %s171 = sadd.s32 %s164, %s170
    %s172 = sld [smem:[#allocation9 + $0x2]]
    %s173 = scalar_lea.vmem [#allocation6], %s172
    %v174 = vld [vmem:[%s173] sm:$0x1]
    %v175 = vadd.f32 %v168, %v174
    %p176 = scmp.ne.s32.totalorder %s172, 0
    %s177 = scalar_select %p176, 1, 0
    %s178 = sadd.s32 %s171, %s177
    %s179 = sld [smem:[#allocation9 + $0x3]]
    %s180 = scalar_lea.vmem [#allocation6], %s179
    %v181 = vld [vmem:[%s180] sm:$0x1]
    %v182 = vadd.f32 %v175, %v181
    %p183 = scmp.ne.s32.totalorder %s179, 0
    %s184 = scalar_select %p183, 1, 0
    %s185 = sadd.s32 %s178, %s184
    %p186 = scmp.gt.s32.totalorder %s185, 1
    %s187 = scalar_select %p186, %s185, 1
    %s188 = scvt.s32.f32 %s187
    %v189 = vstv %s188
    %v190 = vrcp.pop %v189
    %v191 = vmul.f32 %v189, %v190
    %v192 = vsub.f32 1.0, %v191
    %v193 = vmul.f32 %v190, %v192
    %v194 = vadd.f32 %v190, %v193
    %vm195 = vweird.f32 %v189
    %vm196 = vweird.f32 %v190
    %vm197 = vmor %vm195, %vm196
    %v198 = vsel %vm197, %v190, %v194
    %v199 = vand.u32 2147483647, %v189
    %vm200 = vcmp.eq.f32.partialorder %v199, 8.507059e+37
    %v201 = vand.u32 %v189, 2147483648
    %v202 = vor.u32 1.1754944e-38, %v201
    %v203 = vsel %vm200, %v202, %v198
    %v204 = vmul.f32 %v182, %v203
    %s205 = sld [smem:[#allocation9 + $0x80]]
    %s206 = scalar_lea.vmem [#allocation6], %s205
    %v207 = vld [vmem:[%s206] sm:$0x1]
    %v208 = vadd.f32 %v207, 0.0
    %p209 = scmp.ne.s32.totalorder %s205, 0
    %s210 = scalar_select %p209, 1, 0
    %s211 = sld [smem:[#allocation9 + $0x81]]
    %s212 = scalar_lea.vmem [#allocation6], %s211
    %v213 = vld [vmem:[%s212] sm:$0x1]
    %v214 = vadd.f32 %v208, %v213
    %p215 = scmp.ne.s32.totalorder %s211, 0
    %s216 = scalar_select %p215, 1, 0
    %s217 = sadd.s32 %s210, %s216
    %s218 = sld [smem:[#allocation9 + $0x82]]
    %s219 = scalar_lea.vmem [#allocation6], %s218
    %v220 = vld [vmem:[%s219] sm:$0x1]
    %v221 = vadd.f32 %v214, %v220
    %p222 = scmp.ne.s32.totalorder %s218, 0
    %s223 = scalar_select %p222, 1, 0
    %s224 = sadd.s32 %s217, %s223
    %s225 = sld [smem:[#allocation9 + $0x83]]
    %s226 = scalar_lea.vmem [#allocation6], %s225
    %v227 = vld [vmem:[%s226] sm:$0x1]
    %v228 = vadd.f32 %v221, %v227
    %p229 = scmp.ne.s32.totalorder %s225, 0
    %s230 = scalar_select %p229, 1, 0
    %s231 = sadd.s32 %s224, %s230
    %p232 = scmp.gt.s32.totalorder %s231, 1
    %s233 = scalar_select %p232, %s231, 1
    %s234 = scvt.s32.f32 %s233
    %v235 = vstv %s234
    %v236 = vrcp.pop %v235
    %v237 = vmul.f32 %v235, %v236
    %v238 = vsub.f32 1.0, %v237
    %v239 = vmul.f32 %v236, %v238
    %v240 = vadd.f32 %v236, %v239
    %vm241 = vweird.f32 %v235
    %vm242 = vweird.f32 %v236
    %vm243 = vmor %vm241, %vm242
    %v244 = vsel %vm243, %v236, %v240
    %v245 = vand.u32 2147483647, %v235
    %vm246 = vcmp.eq.f32.partialorder %v245, 8.507059e+37
    %v247 = vand.u32 %v235, 2147483648
    %v248 = vor.u32 1.1754944e-38, %v247
    %v249 = vsel %vm246, %v248, %v244
    %v250 = vmul.f32 %v228, %v249
    %v252 = vperm.slane %v250, 0
    %vm254 = vcmask 1040384
    %v255 = vsel %vm254, %v204, %v252
    %s256 = sld [smem:[#allocation8]]
    %s257 = scalar_lea.vmem [#allocation6], %s256
    %v258 = vld [vmem:[%s257] sm:$0x1]
    %s259 = sld [smem:[#allocation8 + $0x80]]
    %s260 = scalar_lea.vmem [#allocation6], %s259
    %v261 = vld [vmem:[%s260] sm:$0x1]
    %s262 = sld [smem:[#allocation8 + $0x1]]
    %s263 = scalar_lea.vmem [#allocation6], %s262
    %v264 = vld [vmem:[%s263] sm:$0x1]
    %s265 = sld [smem:[#allocation8 + $0x81]]
    %s266 = scalar_lea.vmem [#allocation6], %s265
    %v267 = vld [vmem:[%s266] sm:$0x1]
    %s268 = sld [smem:[#allocation8 + $0x2]]
    %s269 = scalar_lea.vmem [#allocation6], %s268
    %v270 = vld [vmem:[%s269] sm:$0x1]
    %s271 = sld [smem:[#allocation8 + $0x82]]
    %s272 = scalar_lea.vmem [#allocation6], %s271
    %v273 = vld [vmem:[%s272] sm:$0x1]
    %s274 = sld [smem:[#allocation8 + $0x3]]
    %s275 = scalar_lea.vmem [#allocation6], %s274
    %v276 = vld [vmem:[%s275] sm:$0x1]
    %s277 = sld [smem:[#allocation8 + $0x83]]
    %s278 = scalar_lea.vmem [#allocation6], %s277
    %v279 = vld [vmem:[%s278] sm:$0x1]
    %s280 = sld [smem:[#allocation8 + $0x4]]
    %s281 = scalar_lea.vmem [#allocation6], %s280
    %v282 = vld [vmem:[%s281] sm:$0x1]
    %s283 = sld [smem:[#allocation8 + $0x84]]
    %s284 = scalar_lea.vmem [#allocation6], %s283
    %v285 = vld [vmem:[%s284] sm:$0x1]
    %s286 = sld [smem:[#allocation8 + $0x5]]
    %s287 = scalar_lea.vmem [#allocation6], %s286
    %v288 = vld [vmem:[%s287] sm:$0x1]
    %s289 = sld [smem:[#allocation8 + $0x85]]
    %s290 = scalar_lea.vmem [#allocation6], %s289
    %v291 = vld [vmem:[%s290] sm:$0x1]
    %s292 = sld [smem:[#allocation8 + $0x6]]
    %s293 = scalar_lea.vmem [#allocation6], %s292
    %v294 = vld [vmem:[%s293] sm:$0x1]
    %s295 = sld [smem:[#allocation8 + $0x86]]
    %s296 = scalar_lea.vmem [#allocation6], %s295
    %v297 = vld [vmem:[%s296] sm:$0x1]
    %s298 = sld [smem:[#allocation8 + $0x7]]
    %s299 = scalar_lea.vmem [#allocation6], %s298
    %v300 = vld [vmem:[%s299] sm:$0x1]
    %s301 = sld [smem:[#allocation8 + $0x87]]
    %s302 = scalar_lea.vmem [#allocation6], %s301
    %v303 = vld [vmem:[%s302] sm:$0x1]
    %v305 = vperm.slane %v261, 0
    %v308 = vperm.slane %v264, 0
    %v311 = vperm.slane %v267, 0
    %v314 = vperm.slane %v270, 0
    %v317 = vperm.slane %v273, 0
    %v320 = vperm.slane %v276, 0
    %v323 = vperm.slane %v279, 0
    %v326 = vperm.slane %v285, 0
    %v329 = vperm.slane %v288, 0
    %v332 = vperm.slane %v291, 0
    %v335 = vperm.slane %v294, 0
    %v338 = vperm.slane %v297, 0
    %v341 = vperm.slane %v300, 0
    %v344 = vperm.slane %v303, 0
    %v346 = vsel %vm254, %v258, %v305
    %vm347 = vcmask 1041408
    %v348 = vsel %vm347, %v346, %v308
    %vm349 = vcmask 1042432
    %v350 = vsel %vm349, %v348, %v311
    %vm351 = vcmask 1043456
    %v352 = vsel %vm351, %v350, %v314
    %vm353 = vcmask 1044480
    %v354 = vsel %vm353, %v352, %v317
    %vm355 = vcmask 1045504
    %v356 = vsel %vm355, %v354, %v320
    %vm357 = vcmask 1046528
    %v358 = vsel %vm357, %v356, %v323
    %v359 = vsel %vm254, %v282, %v326
    %v360 = vsel %vm347, %v359, %v329
    %v361 = vsel %vm349, %v360, %v332
    %v362 = vsel %vm351, %v361, %v335
    %v363 = vsel %vm353, %v362, %v338
    %v364 = vsel %vm355, %v363, %v341
    %v365 = vsel %vm357, %v364, %v344
    %p366 = scmp.ne.s32.totalorder %s256, 0
    %s367 = scalar_select %p366, 1, 0
    %s368 = scvt.s32.f32 %s367
    %v369 = vstv %s368
    %p370 = scmp.ne.s32.totalorder %s259, 0
    %s371 = scalar_select %p370, 1, 0
    %s372 = scvt.s32.f32 %s371
    %v373 = vstv %s372
    %v374 = vsel %vm254, %v369, %v373
    %p375 = scmp.ne.s32.totalorder %s262, 0
    %s376 = scalar_select %p375, 1, 0
    %s377 = scvt.s32.f32 %s376
    %v378 = vstv %s377
    %p379 = scmp.ne.s32.totalorder %s265, 0
    %s380 = scalar_select %p379, 1, 0
    %s381 = scvt.s32.f32 %s380
    %v382 = vstv %s381
    %v383 = vsel %vm254, %v378, %v382
    %p384 = scmp.ne.s32.totalorder %s268, 0
    %s385 = scalar_select %p384, 1, 0
    %s386 = scvt.s32.f32 %s385
    %v387 = vstv %s386
    %p388 = scmp.ne.s32.totalorder %s271, 0
    %s389 = scalar_select %p388, 1, 0
    %s390 = scvt.s32.f32 %s389
    %v391 = vstv %s390
    %v392 = vsel %vm254, %v387, %v391
    %p393 = scmp.ne.s32.totalorder %s274, 0
    %s394 = scalar_select %p393, 1, 0
    %s395 = scvt.s32.f32 %s394
    %v396 = vstv %s395
    %p397 = scmp.ne.s32.totalorder %s277, 0
    %s398 = scalar_select %p397, 1, 0
    %s399 = scvt.s32.f32 %s398
    %v400 = vstv %s399
    %v401 = vsel %vm254, %v396, %v400
    %p402 = scmp.ne.s32.totalorder %s280, 0
    %s403 = scalar_select %p402, 1, 0
    %s404 = scvt.s32.f32 %s403
    %v405 = vstv %s404
    %p406 = scmp.ne.s32.totalorder %s283, 0
    %s407 = scalar_select %p406, 1, 0
    %s408 = scvt.s32.f32 %s407
    %v409 = vstv %s408
    %v410 = vsel %vm254, %v405, %v409
    %p411 = scmp.ne.s32.totalorder %s286, 0
    %s412 = scalar_select %p411, 1, 0
    %s413 = scvt.s32.f32 %s412
    %v414 = vstv %s413
    %p415 = scmp.ne.s32.totalorder %s289, 0
    %s416 = scalar_select %p415, 1, 0
    %s417 = scvt.s32.f32 %s416
    %v418 = vstv %s417
    %v419 = vsel %vm254, %v414, %v418
    %p420 = scmp.ne.s32.totalorder %s292, 0
    %s421 = scalar_select %p420, 1, 0
    %s422 = scvt.s32.f32 %s421
    %v423 = vstv %s422
    %p424 = scmp.ne.s32.totalorder %s295, 0
    %s425 = scalar_select %p424, 1, 0
    %s426 = scvt.s32.f32 %s425
    %v427 = vstv %s426
    %v428 = vsel %vm254, %v423, %v427
    %p429 = scmp.ne.s32.totalorder %s298, 0
    %s430 = scalar_select %p429, 1, 0
    %s431 = scvt.s32.f32 %s430
    %v432 = vstv %s431
    %p433 = scmp.ne.s32.totalorder %s301, 0
    %s434 = scalar_select %p433, 1, 0
    %s435 = scvt.s32.f32 %s434
    %v436 = vstv %s435
    %v437 = vsel %vm254, %v432, %v436
    %v438 = vperm.slane %v111, 0
    %439 = vmatpush.msra.mxu0 %v90
    %440 = vmatpush.msra.mxu0 %v89
    %441 = vmatpush.msra.mxu0 %v88
    %442 = vmatpush.msra.mxu0 %v87
    %443 = vmatpush.msra.mxu0 %v86
    %444 = vmatpush.msra.mxu0 %v85
    %445 = vmatpush.msra.mxu0 %v84
    %446 = vmatpush.msra.mxu0 %v83
    %447 = vmatpush.msra.mxu0 %v82
    %448 = vmatpush.msra.mxu0 %v81
    %449 = vmatpush.msra.mxu0 %v80
    %450 = vmatpush.msra.mxu0 %v79
    %451 = vmatpush.msra.mxu0 %v78
    %452 = vmatpush.msra.mxu0 %v77
    %453 = vmatpush.msra.mxu0 %v76
    %454 = vmatpush.msra.mxu0 %v75
    %455 = vmatmul.f32.gmra.mxu0 %v255
    %v456 = vpop.f32.mrf.mxu0
    %v457 = vadd.f32 %v438, %v456
    %458 = vdwg.mxu0
    %459 = vmatpush.msra.mxu0 %v106
    %460 = vmatpush.msra.mxu0 %v105
    %461 = vmatpush.msra.mxu0 %v104
    %462 = vmatpush.msra.mxu0 %v103
    %463 = vmatpush.msra.mxu0 %v102
    %464 = vmatpush.msra.mxu0 %v101
    %465 = vmatpush.msra.mxu0 %v100
    %466 = vmatpush.msra.mxu0 %v99
    %467 = vmatpush.msra.mxu0 %v98
    %468 = vmatpush.msra.mxu0 %v97
    %469 = vmatpush.msra.mxu0 %v96
    %470 = vmatpush.msra.mxu0 %v95
    %471 = vmatpush.msra.mxu0 %v94
    %472 = vmatpush.msra.mxu0 %v93
    %473 = vmatpush.msra.mxu0 %v92
    %474 = vmatpush.msra.mxu0 %v91
    %475 = vmatmul.f32.gmra.mxu0 %v358
    %v476 = vpop.f32.mrf.mxu0
    %v477 = vadd.f32 0.0, %v476
    %478 = vmatmul.f32.gmra.mxu0 %v365
    %v479 = vpop.f32.mrf.mxu0
    %v480 = vadd.f32 0.0, %v479
    %481 = vdwg.mxu0
    %v482 = vadd.f32 %v457, %v477
    %vm483 = vcmask 261120
    %v485 = vsel %vm483, 0.0, 0
    %487 = vmatpush.msra.mxu0 0.0
    %488 = vmatpush.msra.mxu0 0.0
    %489 = vmatpush.msra.mxu0 0.0
    %490 = vmatpush.msra.mxu0 0.0
    %491 = vmatpush.msra.mxu0 0.0
    %492 = vmatpush.msra.mxu0 0.0
    %493 = vmatpush.msra.mxu0 0.0
    %494 = vmatpush.msra.mxu0 0.0
    %495 = vmatpush.msra.mxu0 0.0
    %496 = vmatpush.msra.mxu0 0.0
    %497 = vmatpush.msra.mxu0 0.0
    %498 = vmatpush.msra.mxu0 0.0
    %499 = vmatpush.msra.mxu0 %v110
    %500 = vmatpush.msra.mxu0 %v109
    %501 = vmatpush.msra.mxu0 %v108
    %502 = vmatpush.msra.mxu0 %v107
    %503 = vmatmul.f32.gmra.mxu0 %v485
    %v504 = vpop.f32.mrf.mxu0
    %v505 = vadd.f32 0.0, %v504
    %506 = vdwg.mxu0
    %v507 = vadd.f32 %v482, %v505
    %v508 = vxor.u32 %v507, 2147483648
    %v509 = vmul.f32 %v508, 1.442695
    %v510 = vpow.pop %v509
    %v511 = vadd.f32 %v510, 1.0
    %v512 = vrcp.pop %v511
    %v513 = vmul.f32 %v511, %v512
    %v514 = vsub.f32 1.0, %v513
    %v515 = vmul.f32 %v512, %v514
    %v516 = vadd.f32 %v512, %v515
    %vm517 = vweird.f32 %v511
    %vm518 = vweird.f32 %v512
    %vm519 = vmor %vm517, %vm518
    %v520 = vsel %vm519, %v512, %v516
    %v521 = vand.u32 2147483647, %v511
    %vm522 = vcmp.eq.f32.partialorder %v521, 8.507059e+37
    %v523 = vand.u32 %v511, 2147483648
    %v524 = vor.u32 1.1754944e-38, %v523
    %v525 = vsel %vm522, %v524, %v520
    %v526 = vmul.f32 1.0, %v525
    %v527 = vmul.f32 %v526, 2.0
    %v528 = vsub.f32 %v527, 1.0
    %v529 = vmul.f32 %v526, 0.0
    %531 = vrot.lane.b32.xlu0 %v528, 64
    %v532 = vpop.permute.xlu0 %531
    %v534 = vmul.f32 %v526, %v532
    %536 = vrot.lane.b32.xlu0 %v534, 32
    %v537 = vpop.permute.xlu0 %536
    %v539 = vadd.f32 %v529, %v537
    %v540 = vtanh.pop %v539
    %542 = vrot.lane.b32.xlu0 %v540, 64
    %v543 = vpop.permute.xlu0 %542
    %v545 = vmul.f32 %v526, %v543
    %547 = vrot.lane.b32.xlu0 %v545, 32
    %v548 = vpop.permute.xlu0 %547
    %v550 = vmul.f32 %v374, %v548
    %v551 = vadd.f32 %v550, 0.0
    %553 = vrot.lane.b32.xlu0 %v539, 96
    %v554 = vpop.permute.xlu0 %553
    %v556 = vmul.f32 %v374, %v554
    %v557 = vadd.f32 %v556, 0.0
    %v559 = vsel %vm483, %v550, 0
    %561 = vmatpush.msra.mxu0 0.0
    %562 = vmatpush.msra.mxu0 0.0
    %563 = vmatpush.msra.mxu0 0.0
    %564 = vmatpush.msra.mxu0 0.0
    %565 = vmatpush.msra.mxu0 0.0
    %566 = vmatpush.msra.mxu0 0.0
    %567 = vmatpush.msra.mxu0 0.0
    %568 = vmatpush.msra.mxu0 0.0
    %569 = vmatpush.msra.mxu0 0.0
    %570 = vmatpush.msra.mxu0 0.0
    %571 = vmatpush.msra.mxu0 0.0
    %572 = vmatpush.msra.mxu0 0.0
    %573 = vmatpush.msra.mxu0 %v115
    %574 = vmatpush.msra.mxu0 %v114
    %575 = vmatpush.msra.mxu0 %v113
    %576 = vmatpush.msra.mxu0 %v112
    %577 = vmatmul.f32.gmra.mxu0 %v559
    %v578 = vpop.f32.mrf.mxu0
    %v579 = vadd.f32 0.0, %v578
    %580 = vdwg.mxu0
    %v581 = vtanh.pop %v579
    %v582 = vperm.slane %v132, 0
    %v583 = vmul.f32 %v581, %v582
    %v584 = vsel %vm347, %v583, 0.0
    %585 = vadd.xlane.f32.xlu0 %v584
    %v586 = vpop.xlane.xlu0 %585
    %v588 = vrot.slane %v477, 2
    %v590 = vadd.f32 %v457, %v588
    %v592 = vsel %vm483, %v551, 0
    %594 = vmatpush.msra.mxu0 0.0
    %595 = vmatpush.msra.mxu0 0.0
    %596 = vmatpush.msra.mxu0 0.0
    %597 = vmatpush.msra.mxu0 0.0
    %598 = vmatpush.msra.mxu0 0.0
    %599 = vmatpush.msra.mxu0 0.0
    %600 = vmatpush.msra.mxu0 0.0
    %601 = vmatpush.msra.mxu0 0.0
    %602 = vmatpush.msra.mxu0 0.0
    %603 = vmatpush.msra.mxu0 0.0
    %604 = vmatpush.msra.mxu0 0.0
    %605 = vmatpush.msra.mxu0 0.0
    %606 = vmatpush.msra.mxu0 %v110
    %607 = vmatpush.msra.mxu0 %v109
    %608 = vmatpush.msra.mxu0 %v108
    %609 = vmatpush.msra.mxu0 %v107
    %610 = vmatmul.f32.gmra.mxu0 %v592
    %v611 = vpop.f32.mrf.mxu0
    %v612 = vadd.f32 0.0, %v611
    %613 = vdwg.mxu0
    %v614 = vadd.f32 %v590, %v612
    %v615 = vxor.u32 %v614, 2147483648
    %v616 = vmul.f32 %v615, 1.442695
    %v617 = vpow.pop %v616
    %v618 = vadd.f32 %v617, 1.0
    %v619 = vrcp.pop %v618
    %v620 = vmul.f32 %v618, %v619
    %v621 = vsub.f32 1.0, %v620
    %v622 = vmul.f32 %v619, %v621
    %v623 = vadd.f32 %v619, %v622
    %vm624 = vweird.f32 %v618
    %vm625 = vweird.f32 %v619
    %vm626 = vmor %vm624, %vm625
    %v627 = vsel %vm626, %v619, %v623
    %v628 = vand.u32 2147483647, %v618
    %vm629 = vcmp.eq.f32.partialorder %v628, 8.507059e+37
    %v630 = vand.u32 %v618, 2147483648
    %v631 = vor.u32 1.1754944e-38, %v630
    %v632 = vsel %vm629, %v631, %v627
    %v633 = vmul.f32 1.0, %v632
    %v634 = vmul.f32 %v633, 2.0
    %v635 = vsub.f32 %v634, 1.0
    %637 = vrot.lane.b32.xlu0 %v557, 32
    %v638 = vpop.permute.xlu0 %637
    %v640 = vmul.f32 %v633, %v638
    %642 = vrot.lane.b32.xlu0 %v635, 64
    %v643 = vpop.permute.xlu0 %642
    %v645 = vmul.f32 %v633, %v643
    %647 = vrot.lane.b32.xlu0 %v645, 32
    %v648 = vpop.permute.xlu0 %647
    %v650 = vadd.f32 %v640, %v648
    %v651 = vtanh.pop %v650
    %653 = vrot.lane.b32.xlu0 %v651, 64
    %v654 = vpop.permute.xlu0 %653
    %v656 = vmul.f32 %v633, %v654
    %657 = vrot.lane.b32.xlu0 %v551, 96
    %v658 = vpop.permute.xlu0 %657
    %v660 = vsub.f32 %v656, %v658
    %662 = vrot.lane.b32.xlu0 %v660, 32
    %v663 = vpop.permute.xlu0 %662
    %v665 = vmul.f32 %v383, %v663
    %v666 = vadd.f32 %v551, %v665
    %v667 = vsub.f32 %v650, %v638
    %669 = vrot.lane.b32.xlu0 %v667, 96
    %v670 = vpop.permute.xlu0 %669
    %v672 = vmul.f32 %v383, %v670
    %v673 = vadd.f32 %v557, %v672
    %675 = vrot.lane.b32.xlu0 %v656, 32
    %v676 = vpop.permute.xlu0 %675
    %v678 = vmul.f32 %v383, %v676
    %v680 = vsel %vm483, %v678, 0
    %682 = vmatpush.msra.mxu0 0.0
    %683 = vmatpush.msra.mxu0 0.0
    %684 = vmatpush.msra.mxu0 0.0
    %685 = vmatpush.msra.mxu0 0.0
    %686 = vmatpush.msra.mxu0 0.0
    %687 = vmatpush.msra.mxu0 0.0
    %688 = vmatpush.msra.mxu0 0.0
    %689 = vmatpush.msra.mxu0 0.0
    %690 = vmatpush.msra.mxu0 0.0
    %691 = vmatpush.msra.mxu0 0.0
    %692 = vmatpush.msra.mxu0 0.0
    %693 = vmatpush.msra.mxu0 0.0
    %694 = vmatpush.msra.mxu0 %v115
    %695 = vmatpush.msra.mxu0 %v114
    %696 = vmatpush.msra.mxu0 %v113
    %697 = vmatpush.msra.mxu0 %v112
    %698 = vmatmul.f32.gmra.mxu0 %v680
    %v699 = vpop.f32.mrf.mxu0
    %v700 = vadd.f32 0.0, %v699
    %701 = vdwg.mxu0
    %v702 = vtanh.pop %v700
    %v703 = vmul.f32 %v702, %v582
    %v704 = vsel %vm347, %v703, 0.0
    %705 = vadd.xlane.f32.xlu0 %v704
    %v706 = vpop.xlane.xlu0 %705
    %v707 = vrot.slane %v477, 4
    %v709 = vadd.f32 %v457, %v707
    %v711 = vsel %vm483, %v666, 0
    %713 = vmatpush.msra.mxu0 0.0
    %714 = vmatpush.msra.mxu0 0.0
    %715 = vmatpush.msra.mxu0 0.0
    %716 = vmatpush.msra.mxu0 0.0
    %717 = vmatpush.msra.mxu0 0.0
    %718 = vmatpush.msra.mxu0 0.0
    %719 = vmatpush.msra.mxu0 0.0
    %720 = vmatpush.msra.mxu0 0.0
    %721 = vmatpush.msra.mxu0 0.0
    %722 = vmatpush.msra.mxu0 0.0
    %723 = vmatpush.msra.mxu0 0.0
    %724 = vmatpush.msra.mxu0 0.0
    %725 = vmatpush.msra.mxu0 %v110
    %726 = vmatpush.msra.mxu0 %v109
    %727 = vmatpush.msra.mxu0 %v108
    %728 = vmatpush.msra.mxu0 %v107
    %729 = vmatmul.f32.gmra.mxu0 %v711
    %v730 = vpop.f32.mrf.mxu0
    %v731 = vadd.f32 0.0, %v730
    %732 = vdwg.mxu0
    %v733 = vadd.f32 %v709, %v731
    %v734 = vxor.u32 %v733, 2147483648
    %v735 = vmul.f32 %v734, 1.442695
    %v736 = vpow.pop %v735
    %v737 = vadd.f32 %v736, 1.0
    %v738 = vrcp.pop %v737
    %v739 = vmul.f32 %v737, %v738
    %v740 = vsub.f32 1.0, %v739
    %v741 = vmul.f32 %v738, %v740
    %v742 = vadd.f32 %v738, %v741
    %vm743 = vweird.f32 %v737
    %vm744 = vweird.f32 %v738
    %vm745 = vmor %vm743, %vm744
    %v746 = vsel %vm745, %v738, %v742
    %v747 = vand.u32 2147483647, %v737
    %vm748 = vcmp.eq.f32.partialorder %v747, 8.507059e+37
    %v749 = vand.u32 %v737, 2147483648
    %v750 = vor.u32 1.1754944e-38, %v749
    %v751 = vsel %vm748, %v750, %v746
    %v752 = vmul.f32 1.0, %v751
    %v753 = vmul.f32 %v752, 2.0
    %v754 = vsub.f32 %v753, 1.0
    %756 = vrot.lane.b32.xlu0 %v673, 32
    %v757 = vpop.permute.xlu0 %756
    %v759 = vmul.f32 %v752, %v757
    %761 = vrot.lane.b32.xlu0 %v754, 64
    %v762 = vpop.permute.xlu0 %761
    %v764 = vmul.f32 %v752, %v762
    %766 = vrot.lane.b32.xlu0 %v764, 32
    %v767 = vpop.permute.xlu0 %766
    %v769 = vadd.f32 %v759, %v767
    %v770 = vtanh.pop %v769
    %772 = vrot.lane.b32.xlu0 %v770, 64
    %v773 = vpop.permute.xlu0 %772
    %v775 = vmul.f32 %v752, %v773
    %776 = vrot.lane.b32.xlu0 %v666, 96
    %v777 = vpop.permute.xlu0 %776
    %v779 = vsub.f32 %v775, %v777
    %781 = vrot.lane.b32.xlu0 %v779, 32
    %v782 = vpop.permute.xlu0 %781
    %v784 = vmul.f32 %v392, %v782
    %v785 = vadd.f32 %v666, %v784
    %v786 = vsub.f32 %v769, %v757
    %788 = vrot.lane.b32.xlu0 %v786, 96
    %v789 = vpop.permute.xlu0 %788
    %v791 = vmul.f32 %v392, %v789
    %v792 = vadd.f32 %v673, %v791
    %794 = vrot.lane.b32.xlu0 %v775, 32
    %v795 = vpop.permute.xlu0 %794
    %v797 = vmul.f32 %v392, %v795
    %v799 = vsel %vm483, %v797, 0
    %801 = vmatpush.msra.mxu0 0.0
    %802 = vmatpush.msra.mxu0 0.0
    %803 = vmatpush.msra.mxu0 0.0
    %804 = vmatpush.msra.mxu0 0.0
    %805 = vmatpush.msra.mxu0 0.0
    %806 = vmatpush.msra.mxu0 0.0
    %807 = vmatpush.msra.mxu0 0.0
    %808 = vmatpush.msra.mxu0 0.0
    %809 = vmatpush.msra.mxu0 0.0
    %810 = vmatpush.msra.mxu0 0.0
    %811 = vmatpush.msra.mxu0 0.0
    %812 = vmatpush.msra.mxu0 0.0
    %813 = vmatpush.msra.mxu0 %v115
    %814 = vmatpush.msra.mxu0 %v114
    %815 = vmatpush.msra.mxu0 %v113
    %816 = vmatpush.msra.mxu0 %v112
    %817 = vmatmul.f32.gmra.mxu0 %v799
    %v818 = vpop.f32.mrf.mxu0
    %v819 = vadd.f32 0.0, %v818
    %820 = vdwg.mxu0
    %v821 = vtanh.pop %v819
    %v822 = vmul.f32 %v821, %v582
    %v823 = vsel %vm347, %v822, 0.0
    %824 = vadd.xlane.f32.xlu0 %v823
    %v825 = vpop.xlane.xlu0 %824
    %v826 = vrot.slane %v477, 6
    %v828 = vadd.f32 %v457, %v826
    %v830 = vsel %vm483, %v785, 0
    %832 = vmatpush.msra.mxu0 0.0
    %833 = vmatpush.msra.mxu0 0.0
    %834 = vmatpush.msra.mxu0 0.0
    %835 = vmatpush.msra.mxu0 0.0
    %836 = vmatpush.msra.mxu0 0.0
    %837 = vmatpush.msra.mxu0 0.0
    %838 = vmatpush.msra.mxu0 0.0
    %839 = vmatpush.msra.mxu0 0.0
    %840 = vmatpush.msra.mxu0 0.0
    %841 = vmatpush.msra.mxu0 0.0
    %842 = vmatpush.msra.mxu0 0.0
    %843 = vmatpush.msra.mxu0 0.0
    %844 = vmatpush.msra.mxu0 %v110
    %845 = vmatpush.msra.mxu0 %v109
    %846 = vmatpush.msra.mxu0 %v108
    %847 = vmatpush.msra.mxu0 %v107
    %848 = vmatmul.f32.gmra.mxu0 %v830
    %v849 = vpop.f32.mrf.mxu0
    %v850 = vadd.f32 0.0, %v849
    %851 = vdwg.mxu0
    %v852 = vadd.f32 %v828, %v850
    %v853 = vxor.u32 %v852, 2147483648
    %v854 = vmul.f32 %v853, 1.442695
    %v855 = vpow.pop %v854
    %v856 = vadd.f32 %v855, 1.0
    %v857 = vrcp.pop %v856
    %v858 = vmul.f32 %v856, %v857
    %v859 = vsub.f32 1.0, %v858
    %v860 = vmul.f32 %v857, %v859
    %v861 = vadd.f32 %v857, %v860
    %vm862 = vweird.f32 %v856
    %vm863 = vweird.f32 %v857
    %vm864 = vmor %vm862, %vm863
    %v865 = vsel %vm864, %v857, %v861
    %v866 = vand.u32 2147483647, %v856
    %vm867 = vcmp.eq.f32.partialorder %v866, 8.507059e+37
    %v868 = vand.u32 %v856, 2147483648
    %v869 = vor.u32 1.1754944e-38, %v868
    %v870 = vsel %vm867, %v869, %v865
    %v871 = vmul.f32 1.0, %v870
    %v872 = vmul.f32 %v871, 2.0
    %v873 = vsub.f32 %v872, 1.0
    %875 = vrot.lane.b32.xlu0 %v792, 32
    %v876 = vpop.permute.xlu0 %875
    %v878 = vmul.f32 %v871, %v876
    %880 = vrot.lane.b32.xlu0 %v873, 64
    %v881 = vpop.permute.xlu0 %880
    %v883 = vmul.f32 %v871, %v881
    %885 = vrot.lane.b32.xlu0 %v883, 32
    %v886 = vpop.permute.xlu0 %885
    %v888 = vadd.f32 %v878, %v886
    %v889 = vtanh.pop %v888
    %891 = vrot.lane.b32.xlu0 %v889, 64
    %v892 = vpop.permute.xlu0 %891
    %v894 = vmul.f32 %v871, %v892
    %895 = vrot.lane.b32.xlu0 %v785, 96
    %v896 = vpop.permute.xlu0 %895
    %v898 = vsub.f32 %v894, %v896
    %900 = vrot.lane.b32.xlu0 %v898, 32
    %v901 = vpop.permute.xlu0 %900
    %v903 = vmul.f32 %v401, %v901
    %v904 = vadd.f32 %v785, %v903
    %v905 = vsub.f32 %v888, %v876
    %907 = vrot.lane.b32.xlu0 %v905, 96
    %v908 = vpop.permute.xlu0 %907
    %v910 = vmul.f32 %v401, %v908
    %v911 = vadd.f32 %v792, %v910
    %913 = vrot.lane.b32.xlu0 %v894, 32
    %v914 = vpop.permute.xlu0 %913
    %v916 = vmul.f32 %v401, %v914
    %v918 = vsel %vm483, %v916, 0
    %920 = vmatpush.msra.mxu0 0.0
    %921 = vmatpush.msra.mxu0 0.0
    %922 = vmatpush.msra.mxu0 0.0
    %923 = vmatpush.msra.mxu0 0.0
    %924 = vmatpush.msra.mxu0 0.0
    %925 = vmatpush.msra.mxu0 0.0
    %926 = vmatpush.msra.mxu0 0.0
    %927 = vmatpush.msra.mxu0 0.0
    %928 = vmatpush.msra.mxu0 0.0
    %929 = vmatpush.msra.mxu0 0.0
    %930 = vmatpush.msra.mxu0 0.0
    %931 = vmatpush.msra.mxu0 0.0
    %932 = vmatpush.msra.mxu0 %v115
    %933 = vmatpush.msra.mxu0 %v114
    %934 = vmatpush.msra.mxu0 %v113
    %935 = vmatpush.msra.mxu0 %v112
    %936 = vmatmul.f32.gmra.mxu0 %v918
    %v937 = vpop.f32.mrf.mxu0
    %v938 = vadd.f32 0.0, %v937
    %939 = vdwg.mxu0
    %v940 = vtanh.pop %v938
    %v941 = vmul.f32 %v940, %v582
    %v942 = vsel %vm347, %v941, 0.0
    %943 = vadd.xlane.f32.xlu0 %v942
    %v944 = vpop.xlane.xlu0 %943
    %v945 = vadd.f32 %v457, %v480
    %v947 = vsel %vm483, %v904, 0
    %949 = vmatpush.msra.mxu0 0.0
    %950 = vmatpush.msra.mxu0 0.0
    %951 = vmatpush.msra.mxu0 0.0
    %952 = vmatpush.msra.mxu0 0.0
    %953 = vmatpush.msra.mxu0 0.0
    %954 = vmatpush.msra.mxu0 0.0
    %955 = vmatpush.msra.mxu0 0.0
    %956 = vmatpush.msra.mxu0 0.0
    %957 = vmatpush.msra.mxu0 0.0
    %958 = vmatpush.msra.mxu0 0.0
    %959 = vmatpush.msra.mxu0 0.0
    %960 = vmatpush.msra.mxu0 0.0
    %961 = vmatpush.msra.mxu0 %v110
    %962 = vmatpush.msra.mxu0 %v109
    %963 = vmatpush.msra.mxu0 %v108
    %964 = vmatpush.msra.mxu0 %v107
    %965 = vmatmul.f32.gmra.mxu0 %v947
    %v966 = vpop.f32.mrf.mxu0
    %v967 = vadd.f32 0.0, %v966
    %968 = vdwg.mxu0
    %v969 = vadd.f32 %v945, %v967
    %v970 = vxor.u32 %v969, 2147483648
    %v971 = vmul.f32 %v970, 1.442695
    %v972 = vpow.pop %v971
    %v973 = vadd.f32 %v972, 1.0
    %v974 = vrcp.pop %v973
    %v975 = vmul.f32 %v973, %v974
    %v976 = vsub.f32 1.0, %v975
    %v977 = vmul.f32 %v974, %v976
    %v978 = vadd.f32 %v974, %v977
    %vm979 = vweird.f32 %v973
    %vm980 = vweird.f32 %v974
    %vm981 = vmor %vm979, %vm980
    %v982 = vsel %vm981, %v974, %v978
    %v983 = vand.u32 2147483647, %v973
    %vm984 = vcmp.eq.f32.partialorder %v983, 8.507059e+37
    %v985 = vand.u32 %v973, 2147483648
    %v986 = vor.u32 1.1754944e-38, %v985
    %v987 = vsel %vm984, %v986, %v982
    %v988 = vmul.f32 1.0, %v987
    %v989 = vmul.f32 %v988, 2.0
    %v990 = vsub.f32 %v989, 1.0
    %992 = vrot.lane.b32.xlu0 %v911, 32
    %v993 = vpop.permute.xlu0 %992
    %v995 = vmul.f32 %v988, %v993
    %997 = vrot.lane.b32.xlu0 %v990, 64
    %v998 = vpop.permute.xlu0 %997
    %v1000 = vmul.f32 %v988, %v998
    %1002 = vrot.lane.b32.xlu0 %v1000, 32
    %v1003 = vpop.permute.xlu0 %1002
    %v1005 = vadd.f32 %v995, %v1003
    %v1006 = vtanh.pop %v1005
    %1008 = vrot.lane.b32.xlu0 %v1006, 64
    %v1009 = vpop.permute.xlu0 %1008
    %v1011 = vmul.f32 %v988, %v1009
    %1012 = vrot.lane.b32.xlu0 %v904, 96
    %v1013 = vpop.permute.xlu0 %1012
    %v1015 = vsub.f32 %v1011, %v1013
    %1017 = vrot.lane.b32.xlu0 %v1015, 32
    %v1018 = vpop.permute.xlu0 %1017
    %v1020 = vmul.f32 %v410, %v1018
    %v1021 = vadd.f32 %v904, %v1020
    %v1022 = vsub.f32 %v1005, %v993
    %1024 = vrot.lane.b32.xlu0 %v1022, 96
    %v1025 = vpop.permute.xlu0 %1024
    %v1027 = vmul.f32 %v410, %v1025
    %v1028 = vadd.f32 %v911, %v1027
    %1030 = vrot.lane.b32.xlu0 %v1011, 32
    %v1031 = vpop.permute.xlu0 %1030
    %v1033 = vmul.f32 %v410, %v1031
    %v1035 = vsel %vm483, %v1033, 0
    %1037 = vmatpush.msra.mxu0 0.0
    %1038 = vmatpush.msra.mxu0 0.0
    %1039 = vmatpush.msra.mxu0 0.0
    %1040 = vmatpush.msra.mxu0 0.0
    %1041 = vmatpush.msra.mxu0 0.0
    %1042 = vmatpush.msra.mxu0 0.0
    %1043 = vmatpush.msra.mxu0 0.0
    %1044 = vmatpush.msra.mxu0 0.0
    %1045 = vmatpush.msra.mxu0 0.0
    %1046 = vmatpush.msra.mxu0 0.0
    %1047 = vmatpush.msra.mxu0 0.0
    %1048 = vmatpush.msra.mxu0 0.0
    %1049 = vmatpush.msra.mxu0 %v115
    %1050 = vmatpush.msra.mxu0 %v114
    %1051 = vmatpush.msra.mxu0 %v113
    %1052 = vmatpush.msra.mxu0 %v112
    %1053 = vmatmul.f32.gmra.mxu0 %v1035
    %v1054 = vpop.f32.mrf.mxu0
    %v1055 = vadd.f32 0.0, %v1054
    %1056 = vdwg.mxu0
    %v1057 = vtanh.pop %v1055
    %v1058 = vmul.f32 %v1057, %v582
    %v1059 = vsel %vm347, %v1058, 0.0
    %1060 = vadd.xlane.f32.xlu0 %v1059
    %v1061 = vpop.xlane.xlu0 %1060
    %v1063 = vrot.slane %v480, 2
    %v1065 = vadd.f32 %v457, %v1063
    %v1067 = vsel %vm483, %v1021, 0
    %1069 = vmatpush.msra.mxu0 0.0
    %1070 = vmatpush.msra.mxu0 0.0
    %1071 = vmatpush.msra.mxu0 0.0
    %1072 = vmatpush.msra.mxu0 0.0
    %1073 = vmatpush.msra.mxu0 0.0
    %1074 = vmatpush.msra.mxu0 0.0
    %1075 = vmatpush.msra.mxu0 0.0
    %1076 = vmatpush.msra.mxu0 0.0
    %1077 = vmatpush.msra.mxu0 0.0
    %1078 = vmatpush.msra.mxu0 0.0
    %1079 = vmatpush.msra.mxu0 0.0
    %1080 = vmatpush.msra.mxu0 0.0
    %1081 = vmatpush.msra.mxu0 %v110
    %1082 = vmatpush.msra.mxu0 %v109
    %1083 = vmatpush.msra.mxu0 %v108
    %1084 = vmatpush.msra.mxu0 %v107
    %1085 = vmatmul.f32.gmra.mxu0 %v1067
    %v1086 = vpop.f32.mrf.mxu0
    %v1087 = vadd.f32 0.0, %v1086
    %1088 = vdwg.mxu0
    %v1089 = vadd.f32 %v1065, %v1087
    %v1090 = vxor.u32 %v1089, 2147483648
    %v1091 = vmul.f32 %v1090, 1.442695
    %v1092 = vpow.pop %v1091
    %v1093 = vadd.f32 %v1092, 1.0
    %v1094 = vrcp.pop %v1093
    %v1095 = vmul.f32 %v1093, %v1094
    %v1096 = vsub.f32 1.0, %v1095
    %v1097 = vmul.f32 %v1094, %v1096
    %v1098 = vadd.f32 %v1094, %v1097
    %vm1099 = vweird.f32 %v1093
    %vm1100 = vweird.f32 %v1094
    %vm1101 = vmor %vm1099, %vm1100
    %v1102 = vsel %vm1101, %v1094, %v1098
    %v1103 = vand.u32 2147483647, %v1093
    %vm1104 = vcmp.eq.f32.partialorder %v1103, 8.507059e+37
    %v1105 = vand.u32 %v1093, 2147483648
    %v1106 = vor.u32 1.1754944e-38, %v1105
    %v1107 = vsel %vm1104, %v1106, %v1102
    %v1108 = vmul.f32 1.0, %v1107
    %v1109 = vmul.f32 %v1108, 2.0
    %v1110 = vsub.f32 %v1109, 1.0
    %1112 = vrot.lane.b32.xlu0 %v1028, 32
    %v1113 = vpop.permute.xlu0 %1112
    %v1115 = vmul.f32 %v1108, %v1113
    %1117 = vrot.lane.b32.xlu0 %v1110, 64
    %v1118 = vpop.permute.xlu0 %1117
    %v1120 = vmul.f32 %v1108, %v1118
    %1122 = vrot.lane.b32.xlu0 %v1120, 32
    %v1123 = vpop.permute.xlu0 %1122
    %v1125 = vadd.f32 %v1115, %v1123
    %v1126 = vtanh.pop %v1125
    %1128 = vrot.lane.b32.xlu0 %v1126, 64
    %v1129 = vpop.permute.xlu0 %1128
    %v1131 = vmul.f32 %v1108, %v1129
    %1132 = vrot.lane.b32.xlu0 %v1021, 96
    %v1133 = vpop.permute.xlu0 %1132
    %v1135 = vsub.f32 %v1131, %v1133
    %1137 = vrot.lane.b32.xlu0 %v1135, 32
    %v1138 = vpop.permute.xlu0 %1137
    %v1140 = vmul.f32 %v419, %v1138
    %v1141 = vadd.f32 %v1021, %v1140
    %v1142 = vsub.f32 %v1125, %v1113
    %1144 = vrot.lane.b32.xlu0 %v1142, 96
    %v1145 = vpop.permute.xlu0 %1144
    %v1147 = vmul.f32 %v419, %v1145
    %v1148 = vadd.f32 %v1028, %v1147
    %1150 = vrot.lane.b32.xlu0 %v1131, 32
    %v1151 = vpop.permute.xlu0 %1150
    %v1153 = vmul.f32 %v419, %v1151
    %v1155 = vsel %vm483, %v1153, 0
    %1157 = vmatpush.msra.mxu0 0.0
    %1158 = vmatpush.msra.mxu0 0.0
    %1159 = vmatpush.msra.mxu0 0.0
    %1160 = vmatpush.msra.mxu0 0.0
    %1161 = vmatpush.msra.mxu0 0.0
    %1162 = vmatpush.msra.mxu0 0.0
    %1163 = vmatpush.msra.mxu0 0.0
    %1164 = vmatpush.msra.mxu0 0.0
    %1165 = vmatpush.msra.mxu0 0.0
    %1166 = vmatpush.msra.mxu0 0.0
    %1167 = vmatpush.msra.mxu0 0.0
    %1168 = vmatpush.msra.mxu0 0.0
    %1169 = vmatpush.msra.mxu0 %v115
    %1170 = vmatpush.msra.mxu0 %v114
    %1171 = vmatpush.msra.mxu0 %v113
    %1172 = vmatpush.msra.mxu0 %v112
    %1173 = vmatmul.f32.gmra.mxu0 %v1155
    %v1174 = vpop.f32.mrf.mxu0
    %v1175 = vadd.f32 0.0, %v1174
    %1176 = vdwg.mxu0
    %v1177 = vtanh.pop %v1175
    %v1178 = vmul.f32 %v1177, %v582
    %v1179 = vsel %vm347, %v1178, 0.0
    %1180 = vadd.xlane.f32.xlu0 %v1179
    %v1181 = vpop.xlane.xlu0 %1180
    %v1182 = vrot.slane %v480, 4
    %v1184 = vadd.f32 %v457, %v1182
    %v1186 = vsel %vm483, %v1141, 0
    %1188 = vmatpush.msra.mxu0 0.0
    %1189 = vmatpush.msra.mxu0 0.0
    %1190 = vmatpush.msra.mxu0 0.0
    %1191 = vmatpush.msra.mxu0 0.0
    %1192 = vmatpush.msra.mxu0 0.0
    %1193 = vmatpush.msra.mxu0 0.0
    %1194 = vmatpush.msra.mxu0 0.0
    %1195 = vmatpush.msra.mxu0 0.0
    %1196 = vmatpush.msra.mxu0 0.0
    %1197 = vmatpush.msra.mxu0 0.0
    %1198 = vmatpush.msra.mxu0 0.0
    %1199 = vmatpush.msra.mxu0 0.0
    %1200 = vmatpush.msra.mxu0 %v110
    %1201 = vmatpush.msra.mxu0 %v109
    %1202 = vmatpush.msra.mxu0 %v108
    %1203 = vmatpush.msra.mxu0 %v107
    %1204 = vmatmul.f32.gmra.mxu0 %v1186
    %v1205 = vpop.f32.mrf.mxu0
    %v1206 = vadd.f32 0.0, %v1205
    %1207 = vdwg.mxu0
    %v1208 = vadd.f32 %v1184, %v1206
    %v1209 = vxor.u32 %v1208, 2147483648
    %v1210 = vmul.f32 %v1209, 1.442695
    %v1211 = vpow.pop %v1210
    %v1212 = vadd.f32 %v1211, 1.0
    %v1213 = vrcp.pop %v1212
    %v1214 = vmul.f32 %v1212, %v1213
    %v1215 = vsub.f32 1.0, %v1214
    %v1216 = vmul.f32 %v1213, %v1215
    %v1217 = vadd.f32 %v1213, %v1216
    %vm1218 = vweird.f32 %v1212
    %vm1219 = vweird.f32 %v1213
    %vm1220 = vmor %vm1218, %vm1219
    %v1221 = vsel %vm1220, %v1213, %v1217
    %v1222 = vand.u32 2147483647, %v1212
    %vm1223 = vcmp.eq.f32.partialorder %v1222, 8.507059e+37
    %v1224 = vand.u32 %v1212, 2147483648
    %v1225 = vor.u32 1.1754944e-38, %v1224
    %v1226 = vsel %vm1223, %v1225, %v1221
    %v1227 = vmul.f32 1.0, %v1226
    %v1228 = vmul.f32 %v1227, 2.0
    %v1229 = vsub.f32 %v1228, 1.0
    %1231 = vrot.lane.b32.xlu0 %v1148, 32
    %v1232 = vpop.permute.xlu0 %1231
    %v1234 = vmul.f32 %v1227, %v1232
    %1236 = vrot.lane.b32.xlu0 %v1229, 64
    %v1237 = vpop.permute.xlu0 %1236
    %v1239 = vmul.f32 %v1227, %v1237
    %1241 = vrot.lane.b32.xlu0 %v1239, 32
    %v1242 = vpop.permute.xlu0 %1241
    %v1244 = vadd.f32 %v1234, %v1242
    %v1245 = vtanh.pop %v1244
    %1247 = vrot.lane.b32.xlu0 %v1245, 64
    %v1248 = vpop.permute.xlu0 %1247
    %v1250 = vmul.f32 %v1227, %v1248
    %1251 = vrot.lane.b32.xlu0 %v1141, 96
    %v1252 = vpop.permute.xlu0 %1251
    %v1254 = vsub.f32 %v1250, %v1252
    %1256 = vrot.lane.b32.xlu0 %v1254, 32
    %v1257 = vpop.permute.xlu0 %1256
    %v1259 = vmul.f32 %v428, %v1257
    %v1260 = vadd.f32 %v1141, %v1259
    %v1261 = vsub.f32 %v1244, %v1232
    %1263 = vrot.lane.b32.xlu0 %v1261, 96
    %v1264 = vpop.permute.xlu0 %1263
    %v1266 = vmul.f32 %v428, %v1264
    %v1267 = vadd.f32 %v1148, %v1266
    %1269 = vrot.lane.b32.xlu0 %v1250, 32
    %v1270 = vpop.permute.xlu0 %1269
    %v1272 = vmul.f32 %v428, %v1270
    %v1274 = vsel %vm483, %v1272, 0
    %1276 = vmatpush.msra.mxu0 0.0
    %1277 = vmatpush.msra.mxu0 0.0
    %1278 = vmatpush.msra.mxu0 0.0
    %1279 = vmatpush.msra.mxu0 0.0
    %1280 = vmatpush.msra.mxu0 0.0
    %1281 = vmatpush.msra.mxu0 0.0
    %1282 = vmatpush.msra.mxu0 0.0
    %1283 = vmatpush.msra.mxu0 0.0
    %1284 = vmatpush.msra.mxu0 0.0
    %1285 = vmatpush.msra.mxu0 0.0
    %1286 = vmatpush.msra.mxu0 0.0
    %1287 = vmatpush.msra.mxu0 0.0
    %1288 = vmatpush.msra.mxu0 %v115
    %1289 = vmatpush.msra.mxu0 %v114
    %1290 = vmatpush.msra.mxu0 %v113
    %1291 = vmatpush.msra.mxu0 %v112
    %1292 = vmatmul.f32.gmra.mxu0 %v1274
    %v1293 = vpop.f32.mrf.mxu0
    %v1294 = vadd.f32 0.0, %v1293
    %1295 = vdwg.mxu0
    %v1296 = vtanh.pop %v1294
    %v1297 = vmul.f32 %v1296, %v582
    %v1298 = vsel %vm347, %v1297, 0.0
    %1299 = vadd.xlane.f32.xlu0 %v1298
    %v1300 = vpop.xlane.xlu0 %1299
    %v1301 = vrot.slane %v480, 6
    %v1303 = vadd.f32 %v457, %v1301
    %v1305 = vsel %vm483, %v1260, 0
    %1307 = vmatpush.msra.mxu0 0.0
    %1308 = vmatpush.msra.mxu0 0.0
    %1309 = vmatpush.msra.mxu0 0.0
    %1310 = vmatpush.msra.mxu0 0.0
    %1311 = vmatpush.msra.mxu0 0.0
    %1312 = vmatpush.msra.mxu0 0.0
    %1313 = vmatpush.msra.mxu0 0.0
    %1314 = vmatpush.msra.mxu0 0.0
    %1315 = vmatpush.msra.mxu0 0.0
    %1316 = vmatpush.msra.mxu0 0.0
    %1317 = vmatpush.msra.mxu0 0.0
    %1318 = vmatpush.msra.mxu0 0.0
    %1319 = vmatpush.msra.mxu0 %v110
    %1320 = vmatpush.msra.mxu0 %v109
    %1321 = vmatpush.msra.mxu0 %v108
    %1322 = vmatpush.msra.mxu0 %v107
    %1323 = vmatmul.f32.gmra.mxu0 %v1305
    %v1324 = vpop.f32.mrf.mxu0
    %v1325 = vadd.f32 0.0, %v1324
    %1326 = vdwg.mxu0
    %v1327 = vadd.f32 %v1303, %v1325
    %v1328 = vxor.u32 %v1327, 2147483648
    %v1329 = vmul.f32 %v1328, 1.442695
    %v1330 = vpow.pop %v1329
    %v1331 = vadd.f32 %v1330, 1.0
    %v1332 = vrcp.pop %v1331
    %v1333 = vmul.f32 %v1331, %v1332
    %v1334 = vsub.f32 1.0, %v1333
    %v1335 = vmul.f32 %v1332, %v1334
    %v1336 = vadd.f32 %v1332, %v1335
    %vm1337 = vweird.f32 %v1331
    %vm1338 = vweird.f32 %v1332
    %vm1339 = vmor %vm1337, %vm1338
    %v1340 = vsel %vm1339, %v1332, %v1336
    %v1341 = vand.u32 2147483647, %v1331
    %vm1342 = vcmp.eq.f32.partialorder %v1341, 8.507059e+37
    %v1343 = vand.u32 %v1331, 2147483648
    %v1344 = vor.u32 1.1754944e-38, %v1343
    %v1345 = vsel %vm1342, %v1344, %v1340
    %v1346 = vmul.f32 1.0, %v1345
    %v1347 = vmul.f32 %v1346, 2.0
    %v1348 = vsub.f32 %v1347, 1.0
    %1350 = vrot.lane.b32.xlu0 %v1267, 32
    %v1351 = vpop.permute.xlu0 %1350
    %v1353 = vmul.f32 %v1346, %v1351
    %1355 = vrot.lane.b32.xlu0 %v1348, 64
    %v1356 = vpop.permute.xlu0 %1355
    %v1358 = vmul.f32 %v1346, %v1356
    %1360 = vrot.lane.b32.xlu0 %v1358, 32
    %v1361 = vpop.permute.xlu0 %1360
    %v1363 = vadd.f32 %v1353, %v1361
    %v1364 = vtanh.pop %v1363
    %1366 = vrot.lane.b32.xlu0 %v1364, 64
    %v1367 = vpop.permute.xlu0 %1366
    %v1369 = vmul.f32 %v1346, %v1367
    %1370 = vrot.lane.b32.xlu0 %v1260, 96
    %v1371 = vpop.permute.xlu0 %1370
    %v1373 = vsub.f32 %v1369, %v1371
    %1375 = vrot.lane.b32.xlu0 %v1373, 32
    %v1376 = vpop.permute.xlu0 %1375
    %v1378 = vmul.f32 %v437, %v1376
    %v1379 = vadd.f32 %v1260, %v1378
    %1381 = vrot.lane.b32.xlu0 %v1369, 32
    %v1382 = vpop.permute.xlu0 %1381
    %v1384 = vmul.f32 %v437, %v1382
    %v1386 = vsel %vm483, %v1384, 0
    %1388 = vmatpush.msra.mxu0 0.0
    %1389 = vmatpush.msra.mxu0 0.0
    %1390 = vmatpush.msra.mxu0 0.0
    %1391 = vmatpush.msra.mxu0 0.0
    %1392 = vmatpush.msra.mxu0 0.0
    %1393 = vmatpush.msra.mxu0 0.0
    %1394 = vmatpush.msra.mxu0 0.0
    %1395 = vmatpush.msra.mxu0 0.0
    %1396 = vmatpush.msra.mxu0 0.0
    %1397 = vmatpush.msra.mxu0 0.0
    %1398 = vmatpush.msra.mxu0 0.0
    %1399 = vmatpush.msra.mxu0 0.0
    %1400 = vmatpush.msra.mxu0 %v115
    %1401 = vmatpush.msra.mxu0 %v114
    %1402 = vmatpush.msra.mxu0 %v113
    %1403 = vmatpush.msra.mxu0 %v112
    %1404 = vmatmul.f32.gmra.mxu0 %v1386
    %v1405 = vpop.f32.mrf.mxu0
    %v1406 = vadd.f32 0.0, %v1405
    %1407 = vdwg.mxu0
    %v1408 = vtanh.pop %v1406
    %v1409 = vmul.f32 %v1408, %v582
    %v1410 = vsel %vm347, %v1409, 0.0
    %1411 = vadd.xlane.f32.xlu0 %v1410
    %v1412 = vpop.xlane.xlu0 %1411
    %1413 = vmatpush.msra.mxu0 %v131
    %1414 = vmatpush.msra.mxu0 %v130
    %1415 = vmatpush.msra.mxu0 %v129
    %1416 = vmatpush.msra.mxu0 %v128
    %1417 = vmatpush.msra.mxu0 %v127
    %1418 = vmatpush.msra.mxu0 %v126
    %1419 = vmatpush.msra.mxu0 %v125
    %1420 = vmatpush.msra.mxu0 %v124
    %1421 = vmatpush.msra.mxu0 %v123
    %1422 = vmatpush.msra.mxu0 %v122
    %1423 = vmatpush.msra.mxu0 %v121
    %1424 = vmatpush.msra.mxu0 %v120
    %1425 = vmatpush.msra.mxu0 %v119
    %1426 = vmatpush.msra.mxu0 %v118
    %1427 = vmatpush.msra.mxu0 %v117
    %1428 = vmatpush.msra.mxu0 %v116
    %1429 = vmatmul.f32.gmra.mxu0 %v255
    %v1430 = vpop.f32.mrf.mxu0
    %v1431 = vadd.f32 0.0, %v1430
    %1432 = vdwg.mxu0
    %v1433 = vtanh.pop %v1431
    %v1434 = vperm.slane %v133, 0
    %v1435 = vmul.f32 %v1433, %v1434
    %v1436 = vsel %vm347, %v1435, 0.0
    %1437 = vadd.xlane.f32.xlu0 %v1436
    %v1438 = vpop.xlane.xlu0 %1437
    %vm1439 = vcmask 7168
    %v1440 = vsel %vm1439, %v586, %v706
    %vm1441 = vcmask 15360
    %v1442 = vsel %vm1441, %v1440, %v825
    %vm1443 = vcmask 23552
    %v1444 = vsel %vm1443, %v1442, %v944
    %vm1445 = vcmask 31744
    %v1446 = vsel %vm1445, %v1444, %v1061
    %vm1447 = vcmask 39936
    %v1448 = vsel %vm1447, %v1446, %v1181
    %vm1449 = vcmask 48128
    %v1450 = vsel %vm1449, %v1448, %v1300
    %vm1451 = vcmask 56320
    %v1452 = vsel %vm1451, %v1450, %v1412
    %v1453 = vadd.f32 %v1452, %v1438
    %vm1454 = vcmask 58368
    %v1455 = vsel %vm1454, %v1453, -inf
    %1456 = vmax.xlane.f32.xlu0 %v1455
    %v1457 = vpop.xlane.xlu0 %1456
    %v1458 = vsub.f32 %v1453, %v1457
    %v1459 = vmul.f32 %v1458, 1.442695
    %v1460 = vpow.pop %v1459
    %v1461 = vsel %vm1454, %v1460, 0.0
    %1462 = vadd.xlane.f32.xlu0 %v1461
    %v1463 = vpop.xlane.xlu0 %1462
    %v1464 = vrcp.pop %v1463
    %v1465 = vmul.f32 %v1463, %v1464
    %v1466 = vsub.f32 1.0, %v1465
    %v1467 = vmul.f32 %v1464, %v1466
    %v1468 = vadd.f32 %v1464, %v1467
    %vm1469 = vweird.f32 %v1463
    %vm1470 = vweird.f32 %v1464
    %vm1471 = vmor %vm1469, %vm1470
    %v1472 = vsel %vm1471, %v1464, %v1468
    %v1473 = vand.u32 2147483647, %v1463
    %vm1474 = vcmp.eq.f32.partialorder %v1473, 8.507059e+37
    %v1475 = vand.u32 %v1463, 2147483648
    %v1476 = vor.u32 1.1754944e-38, %v1475
    %v1477 = vsel %vm1474, %v1476, %v1472
    %v1478 = vmul.f32 %v1460, %v1477
    %1480 = vset.pattern.permute.xlu0 0
    %1481 = vperm.xlu0 %1480, %v1478
    %v1482 = vpop.permute.xlu0 %1481
    %v1484 = vmul.f32 %v1482, %v550
    %v1485 = vadd.f32 %v1484, 0.0
    %1486 = vset.pattern.permute.xlu0 1
    %1487 = vperm.xlu0 %1486, %v1478
    %v1488 = vpop.permute.xlu0 %1487
    %v1490 = vmul.f32 %v1488, %v678
    %v1491 = vadd.f32 %v1485, %v1490
    %1492 = vset.pattern.permute.xlu0 2
    %1493 = vperm.xlu0 %1492, %v1478
    %v1494 = vpop.permute.xlu0 %1493
    %v1496 = vmul.f32 %v1494, %v797
    %v1497 = vadd.f32 %v1491, %v1496
    %1498 = vset.pattern.permute.xlu0 3
    %1499 = vperm.xlu0 %1498, %v1478
    %v1500 = vpop.permute.xlu0 %1499
    %v1502 = vmul.f32 %v1500, %v916
    %v1503 = vadd.f32 %v1497, %v1502
    %1504 = vset.pattern.permute.xlu0 4
    %1505 = vperm.xlu0 %1504, %v1478
    %v1506 = vpop.permute.xlu0 %1505
    %v1508 = vmul.f32 %v1506, %v1033
    %v1509 = vadd.f32 %v1503, %v1508
    %1510 = vset.pattern.permute.xlu0 5
    %1511 = vperm.xlu0 %1510, %v1478
    %v1512 = vpop.permute.xlu0 %1511
    %v1514 = vmul.f32 %v1512, %v1153
    %v1515 = vadd.f32 %v1509, %v1514
    %1516 = vset.pattern.permute.xlu0 6
    %1517 = vperm.xlu0 %1516, %v1478
    %v1518 = vpop.permute.xlu0 %1517
    %v1520 = vmul.f32 %v1518, %v1272
    %v1521 = vadd.f32 %v1515, %v1520
    %1522 = vset.pattern.permute.xlu0 7
    %1523 = vperm.xlu0 %1522, %v1478
    %v1524 = vpop.permute.xlu0 %1523
    %v1526 = vmul.f32 %v1524, %v1384
    %v1527 = vadd.f32 %v1521, %v1526
    %v1529 = vsel %vm483, %v1379, 0
    %1531 = vmatpush.msra.mxu0 0.0
    %1532 = vmatpush.msra.mxu0 0.0
    %1533 = vmatpush.msra.mxu0 0.0
    %1534 = vmatpush.msra.mxu0 0.0
    %1535 = vmatpush.msra.mxu0 0.0
    %1536 = vmatpush.msra.mxu0 0.0
    %1537 = vmatpush.msra.mxu0 0.0
    %1538 = vmatpush.msra.mxu0 0.0
    %1539 = vmatpush.msra.mxu0 0.0
    %1540 = vmatpush.msra.mxu0 0.0
    %1541 = vmatpush.msra.mxu0 0.0
    %1542 = vmatpush.msra.mxu0 0.0
    %1543 = vmatpush.msra.mxu0 %v141
    %1544 = vmatpush.msra.mxu0 %v140
    %1545 = vmatpush.msra.mxu0 %v139
    %1546 = vmatpush.msra.mxu0 %v138
    %1547 = vmatmul.f32.gmra.mxu0 %v1529
    %v1548 = vpop.f32.mrf.mxu0
    %v1549 = vadd.f32 0.0, %v1548
    %1550 = vdwg.mxu0
    %v1552 = vsel %vm483, %v1527, 0
    %1554 = vmatpush.msra.mxu0 0.0
    %1555 = vmatpush.msra.mxu0 0.0
    %1556 = vmatpush.msra.mxu0 0.0
    %1557 = vmatpush.msra.mxu0 0.0
    %1558 = vmatpush.msra.mxu0 0.0
    %1559 = vmatpush.msra.mxu0 0.0
    %1560 = vmatpush.msra.mxu0 0.0
    %1561 = vmatpush.msra.mxu0 0.0
    %1562 = vmatpush.msra.mxu0 0.0
    %1563 = vmatpush.msra.mxu0 0.0
    %1564 = vmatpush.msra.mxu0 0.0
    %1565 = vmatpush.msra.mxu0 0.0
    %1566 = vmatpush.msra.mxu0 %v137
    %1567 = vmatpush.msra.mxu0 %v136
    %1568 = vmatpush.msra.mxu0 %v135
    %1569 = vmatpush.msra.mxu0 %v134
    %1570 = vmatmul.f32.gmra.mxu0 %v1552
    %v1571 = vpop.f32.mrf.mxu0
    %v1572 = vadd.f32 %v1549, %v1571
    %1573 = vdwg.mxu0
    %v1574 = vtanh.pop %v1572
    %v1575 = vperm.slane %v158, 0
    %1576 = vmatpush.msra.mxu0 %v157
    %1577 = vmatpush.msra.mxu0 %v156
    %1578 = vmatpush.msra.mxu0 %v155
    %1579 = vmatpush.msra.mxu0 %v154
    %1580 = vmatpush.msra.mxu0 %v153
    %1581 = vmatpush.msra.mxu0 %v152
    %1582 = vmatpush.msra.mxu0 %v151
    %1583 = vmatpush.msra.mxu0 %v150
    %1584 = vmatpush.msra.mxu0 %v149
    %1585 = vmatpush.msra.mxu0 %v148
    %1586 = vmatpush.msra.mxu0 %v147
    %1587 = vmatpush.msra.mxu0 %v146
    %1588 = vmatpush.msra.mxu0 %v145
    %1589 = vmatpush.msra.mxu0 %v144
    %1590 = vmatpush.msra.mxu0 %v143
    %1591 = vmatpush.msra.mxu0 %v142
    %1592 = vmatmul.f32.gmra.mxu0 %v1574
    %v1593 = vpop.f32.mrf.mxu0
    %v1594 = vadd.f32 %v1575, %v1593
    %1595 = vdwg.mxu0
    %1596 = vst [vmem:[#allocation11] sm:$0x3] %v1594
    // Predicated region
    $region34: #{atae_lstm_forward.1} parent=1 // pred_check
      _
    $region35: #{atae_lstm_forward.1} parent=1 // pred_check_branch
      %1598 = sbr.rel (0) target = $region37
    $region36: #{atae_lstm_forward.1} parent=1 // pred_region
      %1600 = vsyncadd [#allocation4], 0
      %s1602 = sshll.u32 [#allocation11], 4
      %s1603 = int_to_ptr.vmem [resolvable:$true] %s1602
      %s1604 = sshll.u32 %s4, 4
      %s1605 = int_to_ptr.hbm [resolvable:$true] %s1604
      %1607 = dma.vmem_to_hbm [thread:$0]  %s1603, 32, %s1605, [#allocation4]
    $region37: #{atae_lstm_forward.1} parent=1 // pred_fallthru
      _
    // Predicated region
    $region38: #{atae_lstm_forward.1} parent=1 // pred_check
      _
    $region39: #{atae_lstm_forward.1} parent=1 // pred_check_branch
      %1609 = sbr.rel (0) target = $region41
    $region40: #{atae_lstm_forward.1} parent=1 // pred_region
      %1611 = dma.done [#allocation4], 32
    $region41: #{atae_lstm_forward.1} parent=1 // pred_fallthru
      _
    %1612 = vsyncpa [#allocation3], 1
    %1613 = vsyncpa [#allocation7], 1
    %1614 = vsyncpa [#allocation4], 1
    %1615 = vsyncpa [#allocation5], 1
    %1616 = vsyncpa [#allocation10], 1

</llo_original>
